<compile_context>
chip_gen: v7x
topology: tpu7x:2x2x1
jax: 0.10.0
libtpu: 0.0.40
codegen_flags: <defaults>
</compile_context>

<pallas_src>
import functools
import math

import jax
import jax.numpy as jnp
from jax.experimental import pallas as pl
from jax.experimental.pallas import tpu as pltpu


def _round_up(x, m):
    return ((x + m - 1) // m) * m


def _rgcn_layer_kernel(a_ref, x_ref, isrc_ref, idst_ref, w_ref, b_ref,
                       o_ref, ax_ref, *, apply_relu):
    """Grid = (i: dst tile [parallel], r: relation, k: src tile)  (r, k reduce).

    a_ref   : (tm, tk)  bf16  raw 0/1 adjacency tile A[r, i-tile, k-tile]
    x_ref   : (tk, Fi)  f32   source-node feature tile
    isrc_ref: (tk, 1)   f32   D_src^{-1/2}[r] for this k-tile
    idst_ref: (tm, 1)   f32   D_dst^{-1/2}[r] for this i-tile
    w_ref   : (Fi, Fo)  bf16  relation weight W_r
    b_ref   : (1, Fo)   f32   sum_r bias_r
    o_ref   : (tm, Fo)  f32   output tile; resident accumulator over (r, k)
    ax_ref  : (tm, Fi)  f32   VMEM scratch; accumulates A_r @ (inv_src * X) over k
    """
    r = pl.program_id(1)
    k = pl.program_id(2)
    nr = pl.num_programs(1)
    nk = pl.num_programs(2)

    @pl.when((r == 0) & (k == 0))
    def _():
        o_ref[...] = jnp.zeros_like(o_ref)

    @pl.when(k == 0)
    def _():
        ax_ref[...] = jnp.zeros_like(ax_ref)

    # Fused source-side normalization (VPU, hides under the MXU), then a bf16
    # MXU matmul with f32 accumulation.
    x_s = (x_ref[...] * isrc_ref[...]).astype(jnp.bfloat16)
    ax_ref[...] += jnp.dot(a_ref[...], x_s, preferred_element_type=jnp.float32)

    @pl.when(k == nk - 1)
    def _():
        # Destination-side normalization + the per-relation weight matmul,
        # hoisted out of the k loop (done once per (i, r)).
        scaled = (ax_ref[...] * idst_ref[...]).astype(jnp.bfloat16)
        o_ref[...] += jnp.dot(scaled, w_ref[...],
                              preferred_element_type=jnp.float32)

        @pl.when(r == nr - 1)
        def _():
            out = o_ref[...] + b_ref[...]
            if apply_relu:
                out = jnp.maximum(out, 0.0)
            o_ref[...] = out


def rgcn_layer(adj_bf16, inv_src, inv_dst, x, w_bf16, b_sum, *,
               apply_relu, tm, tk):
    """sum_r (Dd^-1/2 A_r Ds^-1/2) X W_r + sum_r b_r, all padded shapes."""
    num_rels, n_pad, _ = adj_bf16.shape
    f_in = x.shape[1]
    f_out = w_bf16.shape[2]
    assert n_pad % tm == 0 and n_pad % tk == 0
    grid = (n_pad // tm, num_rels, n_pad // tk)

    kernel = functools.partial(_rgcn_layer_kernel, apply_relu=apply_relu)
    return pl.pallas_call(
        kernel,
        out_shape=jax.ShapeDtypeStruct((n_pad, f_out), jnp.float32),
        grid_spec=pltpu.PrefetchScalarGridSpec(
            num_scalar_prefetch=0,
            grid=grid,
            in_specs=[
                pl.BlockSpec((None, tm, tk), lambda i, r, k: (r, i, k)),      # A tile
                pl.BlockSpec((tk, f_in), lambda i, r, k: (k, 0)),             # X k-tile
                pl.BlockSpec((None, tk, 1), lambda i, r, k: (r, k, 0)),       # inv_src
                pl.BlockSpec((None, tm, 1), lambda i, r, k: (r, i, 0)),       # inv_dst
                pl.BlockSpec((None, f_in, f_out), lambda i, r, k: (r, 0, 0)),  # W_r
                pl.BlockSpec((1, f_out), lambda i, r, k: (0, 0)),             # bias sum
            ],
            out_specs=pl.BlockSpec((tm, f_out), lambda i, r, k: (i, 0)),
            scratch_shapes=[pltpu.VMEM((tm, f_in), jnp.float32)],
        ),
        compiler_params=pltpu.CompilerParams(
            # dst-tile axis parallel (v7x megacore); relation & src-tile reduce.
            dimension_semantics=("parallel", "arbitrary", "arbitrary"),
            vmem_limit_bytes=48 * 1024 * 1024,   # headroom below v7x's 64 MiB
        ),
    )(adj_bf16, x, inv_src, inv_dst, w_bf16, b_sum)


def rgcn_forward(adj, features, w1, b1, w2, b2, *, tm=256, tk=256):
    """Two RGCN layers.  adj: [R, N, N] (0/1), features: [N, F_in]."""
    num_rels, n, n2 = adj.shape
    assert n == n2
    in_feat = features.shape[1]
    hid_feat = w1.shape[2]
    out_feat = w2.shape[2]

    lane = 128
    n_pad = _round_up(n, math.lcm(tm, tk))
    fi_p = _round_up(in_feat, lane)
    fh_p = _round_up(hid_feat, lane)
    fo_p = _round_up(out_feat, lane)

    # Degrees / normalization vectors in f32 (exact), raw adjacency in bf16
    # (0/1 values are exact in bf16 -> half the dominant HBM traffic).
    adj_f32 = jnp.pad(adj.astype(jnp.float32),
                      ((0, 0), (0, n_pad - n), (0, n_pad - n)))
    deg_dst = jnp.sum(adj_f32, axis=2)                       # [R, N_pad]
    deg_src = jnp.sum(adj_f32, axis=1)                       # [R, N_pad]
    inv_dst = jnp.where(deg_dst > 0, deg_dst ** -0.5, 0.0)[..., None]
    inv_src = jnp.where(deg_src > 0, deg_src ** -0.5, 0.0)[..., None]
    adj_bf = adj_f32.astype(jnp.bfloat16)

    x_p = jnp.pad(features.astype(jnp.float32),
                  ((0, n_pad - n), (0, fi_p - in_feat)))
    w1_p = jnp.pad(w1, ((0, 0), (0, fi_p - in_feat), (0, fh_p - hid_feat))
                   ).astype(jnp.bfloat16)
    w2_p = jnp.pad(w2, ((0, 0), (0, fh_p - hid_feat), (0, fo_p - out_feat))
                   ).astype(jnp.bfloat16)
    b1_s = jnp.pad(jnp.sum(b1, axis=0, keepdims=True),
                   ((0, 0), (0, fh_p - hid_feat)))
    b2_s = jnp.pad(jnp.sum(b2, axis=0, keepdims=True),
                   ((0, 0), (0, fo_p - out_feat)))

    h = rgcn_layer(adj_bf, inv_src, inv_dst, x_p, w1_p, b1_s,
                   apply_relu=True, tm=tm, tk=tk)
    out = rgcn_layer(adj_bf, inv_src, inv_dst, h, w2_p, b2_s,
                     apply_relu=False, tm=tm, tk=tk)
    return out[:n, :out_feat]


class RGCNModelPallas:
    """Two RGCN layers with per-relation GraphConv weights, summed over rels."""

    def __init__(self, in_feat, hidden_feat, out_feat, num_rels, key):
        k1, k2 = jax.random.split(key)

        def glorot(k, fan_in, fan_out):
            limit = (6.0 / (fan_in + fan_out)) ** 0.5
            return jax.random.uniform(
                k, (num_rels, fan_in, fan_out), jnp.float32, -limit, limit)

        self.w1 = glorot(k1, in_feat, hidden_feat)
        self.b1 = jnp.zeros((num_rels, hidden_feat), jnp.float32)
        self.w2 = glorot(k2, hidden_feat, out_feat)
        self.b2 = jnp.zeros((num_rels, out_feat), jnp.float32)

    def __call__(self, adj_matrix, features):
        # TODO(synk): DGL graph construction / per-ntype dict outputs have no
        # Pallas equivalent; a dense per-relation adjacency is used instead.
        return rgcn_forward(adj_matrix, features,
                            self.w1, self.b1, self.w2, self.b2)


def _reference_f32(adj, x, m):
    """Pure f32 JAX reference (exact DGL-style semantics)."""
    adj = adj.astype(jnp.float32)
    deg_dst = adj.sum(2)
    deg_src = adj.sum(1)
    inv_dst = jnp.where(deg_dst > 0, deg_dst ** -0.5, 0.0)
    inv_src = jnp.where(deg_src > 0, deg_src ** -0.5, 0.0)
    a_hat = adj * inv_dst[:, :, None] * inv_src[:, None, :]
    h = jnp.einsum("rnm,mi,rio->no", a_hat, x, m.w1) + m.b1.sum(0)
    h = jnp.maximum(h, 0.0)
    return jnp.einsum("rnm,mi,rio->no", a_hat, h, m.w2) + m.b2.sum(0)


def _reference_bf16(adj, x, m):
    """JAX reference mirroring the kernel's bf16/f32 mixed precision."""
    adj = adj.astype(jnp.float32)
    deg_dst = adj.sum(2)
    deg_src = adj.sum(1)
    inv_dst = jnp.where(deg_dst > 0, deg_dst ** -0.5, 0.0)
    inv_src = jnp.where(deg_src > 0, deg_src ** -0.5, 0.0)
    adj_bf = adj.astype(jnp.bfloat16)

    def layer(xx, w, b, relu):
        xs = (xx[None] * inv_src[:, :, None]).astype(jnp.bfloat16)
        ax = jnp.einsum("rnm,rmf->rnf", adj_bf, xs,
                        preferred_element_type=jnp.float32)
        sc = (ax * inv_dst[:, :, None]).astype(jnp.bfloat16)
        y = jnp.einsum("rnf,rfo->rno", sc, w.astype(jnp.bfloat16),
                       preferred_element_type=jnp.float32).sum(0) + b.sum(0)
        return jnp.maximum(y, 0.0) if relu else y

    h = layer(x, m.w1, m.b1, True)
    return layer(h, m.w2, m.b2, False)


if __name__ == "__main__":
    # Small but non-trivial: N=300 is not a multiple of the tile size, so the
    # padding + multi-tile (2 dst tiles x 3 relations x 2 src tiles) path runs.
    num_nodes = 300
    in_feat, hidden_feat, out_feat, num_rels = 8, 16, 8, 3

    key = jax.random.PRNGKey(0)
    k_adj, k_feat, k_param = jax.random.split(key, 3)

    adj = (jax.random.uniform(k_adj, (num_rels, num_nodes, num_nodes)) < 0.1
           ).astype(jnp.float32)
    features = jax.random.normal(k_feat, (num_nodes, in_feat), jnp.float32)

    model = RGCNModelPallas(in_feat, hidden_feat, out_feat, num_rels, k_param)

    out = jax.block_until_ready(model(adj, features))
    assert out.shape == (num_nodes, out_feat)

    ref_bf16 = _reference_bf16(adj, features, model)   # matched precision
    ref_f32 = _reference_f32(adj, features, model)     # exact semantics
    err_bf16 = float(jnp.max(jnp.abs(out - ref_bf16)))
    err_f32 = float(jnp.max(jnp.abs(out - ref_f32)))
    assert jnp.allclose(out, ref_bf16, atol=1e-2, rtol=1e-2), err_bf16
    assert jnp.allclose(out, ref_f32, atol=5e-2, rtol=5e-2), err_f32

    print("KERNEL_OK")
</pallas_src>

<mosaic_0001>
module attributes {stable_mosaic.version = 11 : i64} {
  func.func @_rgcn_layer_kernel(%arg0: i32, %arg1: i32, %arg2: i32, %arg3: memref<1x256x256xbf16, #tpu.memory_space<vmem>>, %arg4: memref<256x128xf32, #tpu.memory_space<vmem>>, %arg5: memref<1x256x1xf32, #tpu.memory_space<vmem>>, %arg6: memref<1x256x1xf32, #tpu.memory_space<vmem>>, %arg7: memref<1x128x128xbf16, #tpu.memory_space<vmem>>, %arg8: memref<1x128xf32, #tpu.memory_space<vmem>>, %arg9: memref<256x128xf32, #tpu.memory_space<vmem>>, %arg10: memref<256x128xf32, #tpu.memory_space<vmem>>) attributes {dimension_semantics = [#tpu.dimension_semantics<parallel>, #tpu.dimension_semantics<arbitrary>, #tpu.dimension_semantics<arbitrary>], iteration_bounds = array<i64: 2, 3, 2>, scalar_prefetch = 0 : i64, scratch_operands = 1 : i64, tpu.core_type = #tpu.core_type<tc>, window_params = [{transform_indices = @transform_0, window_bounds = array<i64: 1, 256, 256>}, {transform_indices = @transform_1, window_bounds = array<i64: 256, 128>}, {transform_indices = @transform_2, window_bounds = array<i64: 1, 256, 1>}, {transform_indices = @transform_3, window_bounds = array<i64: 1, 256, 1>}, {transform_indices = @transform_4, window_bounds = array<i64: 1, 128, 128>}, {pipeline_mode = #tpu.pipeline_mode<synchronous>, transform_indices = @transform_5, window_bounds = array<i64: 1, 128>}, {transform_indices = @transform_6, window_bounds = array<i64: 256, 128>}]} {
    %c0_i32 = arith.constant 0 : i32
    %0 = arith.cmpi eq, %arg1, %c0_i32 : i32
    %c0_i32_0 = arith.constant 0 : i32
    %1 = arith.cmpi eq, %arg2, %c0_i32_0 : i32
    %2 = arith.andi %0, %1 : i1
    %3 = arith.extui %2 : i1 to i32
    %c0_i32_1 = arith.constant 0 : i32
    %4 = arith.cmpi ne, %3, %c0_i32_1 : i32
    scf.if %4 {
      %cst_16 = arith.constant 0.000000e+00 : f32
      %23 = vector.broadcast %cst_16 : f32 to vector<256x128xf32>
      %c0_17 = arith.constant 0 : index
      %c0_18 = arith.constant 0 : index
      %24 = vector.load %arg9[%c0_17, %c0_18] : memref<256x128xf32, #tpu.memory_space<vmem>>, vector<256x128xf32>
      tpu.vector_store %arg9[%c0_17, %c0_18], %23 {strides = array<i32>} : memref<256x128xf32, #tpu.memory_space<vmem>>, vector<256x128xf32>,
    } else {
    }
    %c0_i32_2 = arith.constant 0 : i32
    %5 = arith.cmpi eq, %arg2, %c0_i32_2 : i32
    %6 = arith.extui %5 : i1 to i32
    %c0_i32_3 = arith.constant 0 : i32
    %7 = arith.cmpi ne, %6, %c0_i32_3 : i32
    scf.if %7 {
      %cst_16 = arith.constant 0.000000e+00 : f32
      %23 = vector.broadcast %cst_16 : f32 to vector<256x128xf32>
      %c0_17 = arith.constant 0 : index
      %c0_18 = arith.constant 0 : index
      %24 = vector.load %arg10[%c0_17, %c0_18] : memref<256x128xf32, #tpu.memory_space<vmem>>, vector<256x128xf32>
      tpu.vector_store %arg10[%c0_17, %c0_18], %23 {strides = array<i32>} : memref<256x128xf32, #tpu.memory_space<vmem>>, vector<256x128xf32>,
    } else {
    }
    %c0 = arith.constant 0 : index
    %c0_4 = arith.constant 0 : index
    %8 = vector.load %arg4[%c0, %c0_4] : memref<256x128xf32, #tpu.memory_space<vmem>>, vector<256x128xf32>
    %c0_5 = arith.constant 0 : index
    %c0_6 = arith.constant 0 : index
    %c0_7 = arith.constant 0 : index
    %9 = vector.load %arg5[%c0_5, %c0_6, %c0_7] : memref<1x256x1xf32, #tpu.memory_space<vmem>>, vector<1x256x1xf32>
    %10 = vector.shape_cast %9 : vector<1x256x1xf32> to vector<256x1xf32>
    %11 = vector.broadcast %10 : vector<256x1xf32> to vector<256x128xf32>
    %12 = arith.mulf %8, %11 : vector<256x128xf32>
    %13 = arith.truncf %12 : vector<256x128xf32> to vector<256x128xbf16>
    %c0_8 = arith.constant 0 : index
    %c0_9 = arith.constant 0 : index
    %14 = vector.load %arg10[%c0_8, %c0_9] : memref<256x128xf32, #tpu.memory_space<vmem>>, vector<256x128xf32>
    %c0_10 = arith.constant 0 : index
    %c0_11 = arith.constant 0 : index
    %c0_12 = arith.constant 0 : index
    %15 = vector.load %arg3[%c0_10, %c0_11, %c0_12] : memref<1x256x256xbf16, #tpu.memory_space<vmem>>, vector<1x256x256xbf16>
    %16 = vector.shape_cast %15 : vector<1x256x256xbf16> to vector<256x256xbf16>
    %cst = arith.constant dense<0.000000e+00> : vector<256x128xf32>
    %17 = tpu.matmul %16, %13, %cst {dimension_numbers = #tpu.dot_dimension_numbers<[1], [0], [0], [1], [0, 0, 1, 1], [], []>} : vector<256x256xbf16>, vector<256x128xbf16>, vector<256x128xf32> -> vector<256x128xf32>
    %18 = arith.addf %14, %17 : vector<256x128xf32>
    %c0_13 = arith.constant 0 : index
    %c0_14 = arith.constant 0 : index
    %19 = vector.load %arg10[%c0_13, %c0_14] : memref<256x128xf32, #tpu.memory_space<vmem>>, vector<256x128xf32>
    tpu.vector_store %arg10[%c0_13, %c0_14], %18 {strides = array<i32>} : memref<256x128xf32, #tpu.memory_space<vmem>>, vector<256x128xf32>,
    %c1_i32 = arith.constant 1 : i32
    %20 = arith.cmpi eq, %arg2, %c1_i32 : i32
    %21 = arith.extui %20 : i1 to i32
    %c0_i32_15 = arith.constant 0 : i32
    %22 = arith.cmpi ne, %21, %c0_i32_15 : i32
    scf.if %22 {
      %c0_16 = arith.constant 0 : index
      %c0_17 = arith.constant 0 : index
      %23 = vector.load %arg10[%c0_16, %c0_17] : memref<256x128xf32, #tpu.memory_space<vmem>>, vector<256x128xf32>
      %c0_18 = arith.constant 0 : index
      %c0_19 = arith.constant 0 : index
      %c0_20 = arith.constant 0 : index
      %24 = vector.load %arg6[%c0_18, %c0_19, %c0_20] : memref<1x256x1xf32, #tpu.memory_space<vmem>>, vector<1x256x1xf32>
      %25 = vector.shape_cast %24 : vector<1x256x1xf32> to vector<256x1xf32>
      %26 = vector.broadcast %25 : vector<256x1xf32> to vector<256x128xf32>
      %27 = arith.mulf %23, %26 : vector<256x128xf32>
      %28 = arith.truncf %27 : vector<256x128xf32> to vector<256x128xbf16>
      %c0_21 = arith.constant 0 : index
      %c0_22 = arith.constant 0 : index
      %29 = vector.load %arg9[%c0_21, %c0_22] : memref<256x128xf32, #tpu.memory_space<vmem>>, vector<256x128xf32>
      %c0_23 = arith.constant 0 : index
      %c0_24 = arith.constant 0 : index
      %c0_25 = arith.constant 0 : index
      %30 = vector.load %arg7[%c0_23, %c0_24, %c0_25] : memref<1x128x128xbf16, #tpu.memory_space<vmem>>, vector<1x128x128xbf16>
      %31 = vector.shape_cast %30 : vector<1x128x128xbf16> to vector<128x128xbf16>
      %cst_26 = arith.constant dense<0.000000e+00> : vector<256x128xf32>
      %32 = tpu.matmul %28, %31, %cst_26 {dimension_numbers = #tpu.dot_dimension_numbers<[1], [0], [0], [1], [0, 0, 1, 1], [], []>} : vector<256x128xbf16>, vector<128x128xbf16>, vector<256x128xf32> -> vector<256x128xf32>
      %33 = arith.addf %29, %32 : vector<256x128xf32>
      %c0_27 = arith.constant 0 : index
      %c0_28 = arith.constant 0 : index
      %34 = vector.load %arg9[%c0_27, %c0_28] : memref<256x128xf32, #tpu.memory_space<vmem>>, vector<256x128xf32>
      tpu.vector_store %arg9[%c0_27, %c0_28], %33 {strides = array<i32>} : memref<256x128xf32, #tpu.memory_space<vmem>>, vector<256x128xf32>,
      %c2_i32 = arith.constant 2 : i32
      %35 = arith.cmpi eq, %arg1, %c2_i32 : i32
      %36 = arith.extui %35 : i1 to i32
      %c0_i32_29 = arith.constant 0 : i32
      %37 = arith.cmpi ne, %36, %c0_i32_29 : i32
      scf.if %37 {
        %c0_30 = arith.constant 0 : index
        %c0_31 = arith.constant 0 : index
        %38 = vector.load %arg9[%c0_30, %c0_31] : memref<256x128xf32, #tpu.memory_space<vmem>>, vector<256x128xf32>
        %c0_32 = arith.constant 0 : index
        %c0_33 = arith.constant 0 : index
        %39 = vector.load %arg8[%c0_32, %c0_33] : memref<1x128xf32, #tpu.memory_space<vmem>>, vector<1x128xf32>
        %40 = vector.broadcast %39 : vector<1x128xf32> to vector<256x128xf32>
        %41 = arith.addf %38, %40 : vector<256x128xf32>
        %cst_34 = arith.constant 0.000000e+00 : f32
        %42 = vector.broadcast %cst_34 : f32 to vector<256x128xf32>
        %43 = arith.maximumf %41, %42 : vector<256x128xf32>
        %c0_35 = arith.constant 0 : index
        %c0_36 = arith.constant 0 : index
        %44 = vector.load %arg9[%c0_35, %c0_36] : memref<256x128xf32, #tpu.memory_space<vmem>>, vector<256x128xf32>
        tpu.vector_store %arg9[%c0_35, %c0_36], %43 {strides = array<i32>} : memref<256x128xf32, #tpu.memory_space<vmem>>, vector<256x128xf32>,
      } else {
      }
    } else {
    }
    return
  }
  func.func @transform_0(%arg0: i32, %arg1: i32, %arg2: i32) -> (i32, i32, i32) {
    %c0_i32 = arith.constant 0 : i32
    return %arg1, %arg0, %arg2 : i32, i32, i32
  }
  func.func @transform_1(%arg0: i32, %arg1: i32, %arg2: i32) -> (i32, i32) {
    %c0_i32 = arith.constant 0 : i32
    %c0_i32_0 = arith.constant 0 : i32
    return %arg2, %c0_i32 : i32, i32
  }
  func.func @transform_2(%arg0: i32, %arg1: i32, %arg2: i32) -> (i32, i32, i32) {
    %c0_i32 = arith.constant 0 : i32
    %c0_i32_0 = arith.constant 0 : i32
    return %arg1, %arg2, %c0_i32 : i32, i32, i32
  }
  func.func @transform_3(%arg0: i32, %arg1: i32, %arg2: i32) -> (i32, i32, i32) {
    %c0_i32 = arith.constant 0 : i32
    %c0_i32_0 = arith.constant 0 : i32
    return %arg1, %arg0, %c0_i32 : i32, i32, i32
  }
  func.func @transform_4(%arg0: i32, %arg1: i32, %arg2: i32) -> (i32, i32, i32) {
    %c0_i32 = arith.constant 0 : i32
    %c0_i32_0 = arith.constant 0 : i32
    %c0_i32_1 = arith.constant 0 : i32
    return %arg1, %c0_i32, %c0_i32_0 : i32, i32, i32
  }
  func.func @transform_5(%arg0: i32, %arg1: i32, %arg2: i32) -> (i32, i32) {
    %c0_i32 = arith.constant 0 : i32
    %c0_i32_0 = arith.constant 0 : i32
    %c0_i32_1 = arith.constant 0 : i32
    return %c0_i32, %c0_i32_0 : i32, i32
  }
  func.func @transform_6(%arg0: i32, %arg1: i32, %arg2: i32) -> (i32, i32) {
    %c0_i32 = arith.constant 0 : i32
    %c0_i32_0 = arith.constant 0 : i32
    return %arg0, %c0_i32 : i32, i32
  }
}

</mosaic_0001>

<llo_original>
// kernel: tpu_custom_call.1
$region0: #{tpu_custom_call.1}
  #allocation0 [shape = 'u32[]', space=smem, size = 0x4, offset = 0x4, fixed_abs, tag = 'smem constant byte address 0x4 - core index']
  #allocation1 [shape = 'u32[144,128]{1,0:T(1,128)}', space=vmem, size = 0x12000, scoped, tag = 'internal scratch']
  #allocation2 [shape = 'f32[256,128]{1,0:T(8,128)}', space=vmem, size = 0x20000, scoped, tag = 'scratch operand']
  %s0 = inlined_call_operand.vmem [shape: bf16[3,512,512], index: 0, kind: input, shape index: {}]
  %s1 = inlined_call_operand.hbm [shape: f32[512,128], index: 1, kind: input, shape index: {}]
  %s2 = inlined_call_operand.vmem [shape: f32[3,512,1], index: 2, kind: input, shape index: {}]
  %s3 = inlined_call_operand.vmem [shape: f32[3,512,1], index: 3, kind: input, shape index: {}]
  %s4 = inlined_call_operand.hbm [shape: bf16[3,128,128], index: 4, kind: input, shape index: {}]
  %s5 = inlined_call_operand.vmem [shape: f32[1,128], index: 5, kind: input, shape index: {}]
  %s6 = inlined_call_operand.hbm [shape: f32[512,128], index: 6, kind: output, shape index: {}]
  %s7 = sld [smem:[#allocation0]]
  $region119: #{tpu_custom_call.1} parent=0
    _
  %s9 = ssub.s32 1, %s7
  %s10 = scalar_select 0, %s9, %s7
  $region1: #{tpu_custom_call.1} parent=0
    #allocation3 [shape = 'u8[262144]{0}', space=vmem, size = 0x40000, scoped, tag = 'input window, operand 0']
    #allocation4 [shape = 'u8[262144]{0}', space=vmem, size = 0x40000, scoped, tag = 'input window, operand 1']
    #allocation5 [shape = 's32[2]{0}', space=sflag, size = 0x8, scoped, tag = 'scoped memory for tpu_custom_call.1']
    #allocation6 [shape = 's32[2]{0}', space=sflag, size = 0x8, scoped, tag = 'scoped memory for tpu_custom_call.1']
    #allocation7 [shape = 'u8[65536]{0}', space=vmem, size = 0x10000, scoped, tag = 'input window, operand 4']
    #allocation8 [shape = 's32[2]{0}', space=sflag, size = 0x8, scoped, tag = 'scoped memory for tpu_custom_call.1']
    #allocation9 [shape = 'u8[262144]{0}', space=vmem, size = 0x40000, scoped, tag = 'output window, operand 0']
    %11 = vsyncpa [#allocation5], 0
    %s12 = scalar_lea.sflag [#allocation5], 1
    %13 = vsyncpa %s12, 0
    %14 = vsyncpa [#allocation8], 0
    %s15 = scalar_lea.sflag [#allocation8], 1
    %16 = vsyncpa %s15, 0
    %17 = vsyncpa [#allocation6], 0
    %s18 = scalar_lea.sflag [#allocation6], 1
    %19 = vsyncpa %s18, 0
    loop: start=0, step=1, limit=14
    $region2: #{tpu_custom_call.1} parent=1 // loop_pre_header
      _
    $region3: #{tpu_custom_call.1} parent=1 // loop_header
      %s21 = sphi 0, %s25
      %p22 = scmp.ge.s32.totalorder %s21, 14
      %s28 = sphi 0, %s47
      %s29 = sphi 0, %s43
      %s30 = sphi 0, %s39
      %s31 = sphi 0, %s28
      %s32 = sphi 0, %s29
      %s33 = sphi 0, %s30
      %s34 = sphi 0, %s31
      %s35 = sphi 0, %s32
      %s36 = sphi 0, %s33
      %s54 = sphi 0, %s56
      %s57 = sphi 0, %s54
      %s58 = sphi 0, %s57
      %s74 = sphi 0, %s58
      %s80 = sphi 0, %s82
      %s83 = sphi 0, %s80
      %s84 = sphi 0, %s83
      %s100 = sphi 0, %s84
      %s108 = sphi 0, %s110
      %s111 = sphi 0, %s108
      %s112 = sphi 0, %s111
      %s128 = sphi 0, %s112
      %s136 = sphi 0, %s138
      %s139 = sphi 0, %s136
      %s140 = sphi 0, %s139
      %s156 = sphi 0, %s140
      %s162 = sphi 0, %s164
      %s165 = sphi 0, %s162
      %s166 = sphi 0, %s165
      %s182 = sphi 0, %s166
      %s186 = sphi 0, %s186
      %s188 = sphi 0, %s186
      %s189 = sphi 0, %s188
      %s203 = sphi 0, %s189
      %s209 = sphi 0, %s211
      %s212 = sphi 0, %s209
      %s213 = sphi 0, %s212
      %s229 = sphi 0, %s213
    $region4: #{tpu_custom_call.1} parent=1 // loop_header_branch
      %24 = sbr.rel (%p22) target = $region8
    $region5: #{tpu_custom_call.1} parent=1 // loop_body
      %s26 = ssub.s32 %s21, 1
      %s27 = ssub.s32 %s21, 2
      %s37 = sadd.s32 1, %s30
      %p38 = scmp.ge.s32.totalorder %s37, 2
      %s39 = scalar_select %p38, 0, %s37
      %s40 = sadd.s32 1, %s29
      %s41 = scalar_select %p38, %s40, %s29
      %p42 = scmp.ge.s32.totalorder %s41, 3
      %s43 = scalar_select %p42, 0, %s41
      %s44 = sadd.s32 1, %s28
      %s45 = scalar_select %p42, %s44, %s28
      %p46 = scmp.ge.s32.totalorder %s45, 2
      %s47 = scalar_select %p46, 0, %s45
      %s48 = ssub.s32 %s29, %s43
      %s49 = ssub.s32 %s28, %s47
      %s50 = sor.u32 %s48, %s49
      %s51 = ssub.s32 %s30, %s39
      %s52 = sor.u32 %s50, %s51
      %p53 = scmp.eq.s32.totalorder %s52, 0
      %s55 = sadd.s32 %s54, 1
      %s56 = scalar_select %p53, %s54, %s55
      %p59 = pneg %p53
      %p60 = scmp.eq.s32.totalorder %s21, 11
      %p61 = por %p59, %p60
      %p62 = scmp.ne.s32.totalorder %s54, %s57
      %p63 = scmp.eq.s32.totalorder %s21, 0
      %p64 = por %p62, %p63
      %p65 = scmp.ne.s32.totalorder %s54, %s57
      %p66 = scmp.eq.s32.totalorder %s26, 11
      %p67 = por %p65, %p66
      %p68 = scmp.ne.s32.totalorder %s57, %s58
      %p69 = scmp.eq.s32.totalorder %s26, 0
      %p70 = por %p68, %p69
      %p71 = scmp.ne.s32.totalorder %s57, %s58
      %p72 = scmp.eq.s32.totalorder %s27, 11
      %p73 = por %p71, %p72
      %p75 = scmp.ne.s32.totalorder %s58, %s74
      %p76 = scmp.eq.s32.totalorder %s27, 0
      %p77 = por %p75, %p76
      %s78 = ssub.s32 %s30, %s39
      %p79 = scmp.eq.s32.totalorder %s78, 0
      %s81 = sadd.s32 %s80, 1
      %s82 = scalar_select %p79, %s80, %s81
      %p85 = pneg %p79
      %p86 = scmp.eq.s32.totalorder %s21, 11
      %p87 = por %p85, %p86
      %p88 = scmp.ne.s32.totalorder %s80, %s83
      %p89 = scmp.eq.s32.totalorder %s21, 0
      %p90 = por %p88, %p89
      %p91 = scmp.ne.s32.totalorder %s80, %s83
      %p92 = scmp.eq.s32.totalorder %s26, 11
      %p93 = por %p91, %p92
      %p94 = scmp.ne.s32.totalorder %s83, %s84
      %p95 = scmp.eq.s32.totalorder %s26, 0
      %p96 = por %p94, %p95
      %p97 = scmp.ne.s32.totalorder %s83, %s84
      %p98 = scmp.eq.s32.totalorder %s27, 11
      %p99 = por %p97, %p98
      %p101 = scmp.ne.s32.totalorder %s84, %s100
      %p102 = scmp.eq.s32.totalorder %s27, 0
      %p103 = por %p101, %p102
      %s104 = ssub.s32 %s29, %s43
      %s105 = ssub.s32 %s30, %s39
      %s106 = sor.u32 %s104, %s105
      %p107 = scmp.eq.s32.totalorder %s106, 0
      %s109 = sadd.s32 %s108, 1
      %s110 = scalar_select %p107, %s108, %s109
      %p113 = pneg %p107
      %p114 = scmp.eq.s32.totalorder %s21, 11
      %p115 = por %p113, %p114
      %p116 = scmp.ne.s32.totalorder %s108, %s111
      %p117 = scmp.eq.s32.totalorder %s21, 0
      %p118 = por %p116, %p117
      %p119 = scmp.ne.s32.totalorder %s108, %s111
      %p120 = scmp.eq.s32.totalorder %s26, 11
      %p121 = por %p119, %p120
      %p122 = scmp.ne.s32.totalorder %s111, %s112
      %p123 = scmp.eq.s32.totalorder %s26, 0
      %p124 = por %p122, %p123
      %p125 = scmp.ne.s32.totalorder %s111, %s112
      %p126 = scmp.eq.s32.totalorder %s27, 11
      %p127 = por %p125, %p126
      %p129 = scmp.ne.s32.totalorder %s112, %s128
      %p130 = scmp.eq.s32.totalorder %s27, 0
      %p131 = por %p129, %p130
      %s132 = ssub.s32 %s29, %s43
      %s133 = ssub.s32 %s28, %s47
      %s134 = sor.u32 %s132, %s133
      %p135 = scmp.eq.s32.totalorder %s134, 0
      %s137 = sadd.s32 %s136, 1
      %s138 = scalar_select %p135, %s136, %s137
      %p141 = pneg %p135
      %p142 = scmp.eq.s32.totalorder %s21, 11
      %p143 = por %p141, %p142
      %p144 = scmp.ne.s32.totalorder %s136, %s139
      %p145 = scmp.eq.s32.totalorder %s21, 0
      %p146 = por %p144, %p145
      %p147 = scmp.ne.s32.totalorder %s136, %s139
      %p148 = scmp.eq.s32.totalorder %s26, 11
      %p149 = por %p147, %p148
      %p150 = scmp.ne.s32.totalorder %s139, %s140
      %p151 = scmp.eq.s32.totalorder %s26, 0
      %p152 = por %p150, %p151
      %p153 = scmp.ne.s32.totalorder %s139, %s140
      %p154 = scmp.eq.s32.totalorder %s27, 11
      %p155 = por %p153, %p154
      %p157 = scmp.ne.s32.totalorder %s140, %s156
      %p158 = scmp.eq.s32.totalorder %s27, 0
      %p159 = por %p157, %p158
      %s160 = ssub.s32 %s29, %s43
      %p161 = scmp.eq.s32.totalorder %s160, 0
      %s163 = sadd.s32 %s162, 1
      %s164 = scalar_select %p161, %s162, %s163
      %p167 = pneg %p161
      %p168 = scmp.eq.s32.totalorder %s21, 11
      %p169 = por %p167, %p168
      %p170 = scmp.ne.s32.totalorder %s162, %s165
      %p171 = scmp.eq.s32.totalorder %s21, 0
      %p172 = por %p170, %p171
      %p173 = scmp.ne.s32.totalorder %s162, %s165
      %p174 = scmp.eq.s32.totalorder %s26, 11
      %p175 = por %p173, %p174
      %p176 = scmp.ne.s32.totalorder %s165, %s166
      %p177 = scmp.eq.s32.totalorder %s26, 0
      %p178 = por %p176, %p177
      %p179 = scmp.ne.s32.totalorder %s165, %s166
      %p180 = scmp.eq.s32.totalorder %s27, 11
      %p181 = por %p179, %p180
      %p183 = scmp.ne.s32.totalorder %s166, %s182
      %p184 = scmp.eq.s32.totalorder %s27, 0
      %p185 = por %p183, %p184
      %s187 = sadd.s32 %s186, 1
      %p190 = scmp.eq.s32.totalorder %s21, 11
      %p191 = scmp.ne.s32.totalorder %s186, %s188
      %p192 = scmp.eq.s32.totalorder %s21, 0
      %p193 = por %p191, %p192
      %p194 = scmp.ne.s32.totalorder %s186, %s188
      %p195 = scmp.eq.s32.totalorder %s26, 11
      %p196 = por %p194, %p195
      %p197 = scmp.ne.s32.totalorder %s188, %s189
      %p198 = scmp.eq.s32.totalorder %s26, 0
      %p199 = por %p197, %p198
      %p200 = scmp.ne.s32.totalorder %s188, %s189
      %p201 = scmp.eq.s32.totalorder %s27, 11
      %p202 = por %p200, %p201
      %p204 = scmp.ne.s32.totalorder %s189, %s203
      %p205 = scmp.eq.s32.totalorder %s27, 0
      %p206 = por %p204, %p205
      %s207 = ssub.s32 %s28, %s47
      %p208 = scmp.eq.s32.totalorder %s207, 0
      %s210 = sadd.s32 %s209, 1
      %s211 = scalar_select %p208, %s209, %s210
      %p214 = pneg %p208
      %p215 = scmp.eq.s32.totalorder %s21, 11
      %p216 = por %p214, %p215
      %p217 = scmp.ne.s32.totalorder %s209, %s212
      %p218 = scmp.eq.s32.totalorder %s21, 0
      %p219 = por %p217, %p218
      %p220 = scmp.ne.s32.totalorder %s209, %s212
      %p221 = scmp.eq.s32.totalorder %s26, 11
      %p222 = por %p220, %p221
      %p223 = scmp.ne.s32.totalorder %s212, %s213
      %p224 = scmp.eq.s32.totalorder %s26, 0
      %p225 = por %p223, %p224
      %p226 = scmp.ne.s32.totalorder %s212, %s213
      %p227 = scmp.eq.s32.totalorder %s27, 11
      %p228 = por %p226, %p227
      %p230 = scmp.ne.s32.totalorder %s213, %s229
      %p231 = scmp.eq.s32.totalorder %s27, 0
      %p232 = por %p230, %p231
      %p233 = scmp.le.s32.totalorder 1, %s21
      %p234 = scmp.lt.s32.totalorder %s21, 13
      %p235 = pnand %p233, %p234
      %p236 = pneg %p235
      // Predicated region
      $region9: #{tpu_custom_call.1} parent=5 // pred_check
        _
      $region10: #{tpu_custom_call.1} parent=5 // pred_check_branch
        %238 = sbr.rel (%p235) target = $region12
      $region11: #{tpu_custom_call.1} parent=5 // pred_region
        %s239 = ssub.s32 %s21, 1
        // Predicated region
        $region13: #{tpu_custom_call.1} parent=11 // pred_check
          %p240 = pneg %p199
        $region14: #{tpu_custom_call.1} parent=11 // pred_check_branch
          %242 = sbr.rel (%p240) target = $region16
        $region15: #{tpu_custom_call.1} parent=11 // pred_region
          _
        $region16: #{tpu_custom_call.1} parent=11 // pred_fallthru
          _
      $region12: #{tpu_custom_call.1} parent=5 // pred_fallthru
        _
      %p243 = scmp.lt.s32.totalorder %s21, 12
      // Predicated region
      $region17: #{tpu_custom_call.1} parent=5 // pred_check
        %p244 = pneg %p243
      $region18: #{tpu_custom_call.1} parent=5 // pred_check_branch
        %246 = sbr.rel (%p244) target = $region20
      $region19: #{tpu_custom_call.1} parent=5 // pred_region
        // Predicated region
        $region21: #{tpu_custom_call.1} parent=19 // pred_check
          %p247 = pneg %p64
        $region22: #{tpu_custom_call.1} parent=19 // pred_check_branch
          %249 = sbr.rel (%p247) target = $region24
        $region23: #{tpu_custom_call.1} parent=19 // pred_region
          %s250 = sand.u32 %s54, 1
          %s251 = sand.u32 %s54, 1
          %s252 = smul.addr %s251, 256
          %s253 = scalar_lea.vmem [#allocation3], %s252
          %s254 = smul.u32 32, %s28
          %s255 = smul.u32 2, %s30
          %s256 = smul.addr %s254, 4
          %s257 = sadd.s32 %s255, %s256
          %s258 = smul.addr %s29, 256
          %s259 = sadd.s32 %s257, %s258
          %s260 = smul.addr %s259, 4
          %s261 = scalar_lea.vmem %s0, %s260
          // Predicated region
          $region25: #{tpu_custom_call.1} parent=23 // pred_check
            _
          $region26: #{tpu_custom_call.1} parent=23 // pred_check_branch
            %263 = sbr.rel (0) target = $region28
          $region27: #{tpu_custom_call.1} parent=23 // pred_region
            // Predicated region
            $region29: #{tpu_custom_call.1} parent=27 // pred_check
              _
            $region30: #{tpu_custom_call.1} parent=27 // pred_check_branch
              %265 = sbr.rel (0) target = $region32
            $region31: #{tpu_custom_call.1} parent=27 // pred_region
              // Predicated region
              $region44: #{tpu_custom_call.1} parent=31 // pred_check
                _
              $region45: #{tpu_custom_call.1} parent=31 // pred_check_branch
                %342 = sbr.rel (0) target = $region47
              $region46: #{tpu_custom_call.1} parent=31 // pred_region
                loop: start=0, step=1, limit=1
                $region48: #{tpu_custom_call.1} parent=46 // loop_pre_header
                  _
                $region49: #{tpu_custom_call.1} parent=46 // loop_header
                  %s344 = sphi 0, %s348
                  %p345 = scmp.ge.s32.totalorder %s344, 1
                  %s349 = sphi %s261, %s261
                  %s350 = sphi %s253, %s253
                $region50: #{tpu_custom_call.1} parent=46 // loop_header_branch
                  %347 = sbr.rel (%p345) target = $region54
                $region51: #{tpu_custom_call.1} parent=46 // loop_body
                  %v351 = vld [vmem:[%s349] sm:$0xff]
                  %352 = vst [vmem:[%s350] sm:$0xff] %v351
                  %v353 = vld [vmem:[%s349 + $0x10] sm:$0xff]
                  %354 = vst [vmem:[%s350 + $0x8] sm:$0xff] %v353
                  %v355 = vld [vmem:[%s349 + $0x20] sm:$0xff]
                  %356 = vst [vmem:[%s350 + $0x10] sm:$0xff] %v355
                  %v357 = vld [vmem:[%s349 + $0x30] sm:$0xff]
                  %358 = vst [vmem:[%s350 + $0x18] sm:$0xff] %v357
                  %v359 = vld [vmem:[%s349 + $0x40] sm:$0xff]
                  %360 = vst [vmem:[%s350 + $0x20] sm:$0xff] %v359
                  %v361 = vld [vmem:[%s349 + $0x50] sm:$0xff]
                  %362 = vst [vmem:[%s350 + $0x28] sm:$0xff] %v361
                  %v363 = vld [vmem:[%s349 + $0x60] sm:$0xff]
                  %364 = vst [vmem:[%s350 + $0x30] sm:$0xff] %v363
                  %v365 = vld [vmem:[%s349 + $0x70] sm:$0xff]
                  %366 = vst [vmem:[%s350 + $0x38] sm:$0xff] %v365
                  %v367 = vld [vmem:[%s349 + $0x80] sm:$0xff]
                  %368 = vst [vmem:[%s350 + $0x40] sm:$0xff] %v367
                  %v369 = vld [vmem:[%s349 + $0x90] sm:$0xff]
                  %370 = vst [vmem:[%s350 + $0x48] sm:$0xff] %v369
                  %v371 = vld [vmem:[%s349 + $0xa0] sm:$0xff]
                  %372 = vst [vmem:[%s350 + $0x50] sm:$0xff] %v371
                  %v373 = vld [vmem:[%s349 + $0xb0] sm:$0xff]
                  %374 = vst [vmem:[%s350 + $0x58] sm:$0xff] %v373
                  %v375 = vld [vmem:[%s349 + $0xc0] sm:$0xff]
                  %376 = vst [vmem:[%s350 + $0x60] sm:$0xff] %v375
                  %v377 = vld [vmem:[%s349 + $0xd0] sm:$0xff]
                  %378 = vst [vmem:[%s350 + $0x68] sm:$0xff] %v377
                  %v379 = vld [vmem:[%s349 + $0xe0] sm:$0xff]
                  %380 = vst [vmem:[%s350 + $0x70] sm:$0xff] %v379
                  %v381 = vld [vmem:[%s349 + $0xf0] sm:$0xff]
                  %382 = vst [vmem:[%s350 + $0x78] sm:$0xff] %v381
                  %v383 = vld [vmem:[%s349 + $0x100] sm:$0xff]
                  %384 = vst [vmem:[%s350 + $0x80] sm:$0xff] %v383
                  %v385 = vld [vmem:[%s349 + $0x110] sm:$0xff]
                  %386 = vst [vmem:[%s350 + $0x88] sm:$0xff] %v385
                  %v387 = vld [vmem:[%s349 + $0x120] sm:$0xff]
                  %388 = vst [vmem:[%s350 + $0x90] sm:$0xff] %v387
                  %v389 = vld [vmem:[%s349 + $0x130] sm:$0xff]
                  %390 = vst [vmem:[%s350 + $0x98] sm:$0xff] %v389
                  %v391 = vld [vmem:[%s349 + $0x140] sm:$0xff]
                  %392 = vst [vmem:[%s350 + $0xa0] sm:$0xff] %v391
                  %v393 = vld [vmem:[%s349 + $0x150] sm:$0xff]
                  %394 = vst [vmem:[%s350 + $0xa8] sm:$0xff] %v393
                  %v395 = vld [vmem:[%s349 + $0x160] sm:$0xff]
                  %396 = vst [vmem:[%s350 + $0xb0] sm:$0xff] %v395
                  %v397 = vld [vmem:[%s349 + $0x170] sm:$0xff]
                  %398 = vst [vmem:[%s350 + $0xb8] sm:$0xff] %v397
                  %v399 = vld [vmem:[%s349 + $0x180] sm:$0xff]
                  %400 = vst [vmem:[%s350 + $0xc0] sm:$0xff] %v399
                  %v401 = vld [vmem:[%s349 + $0x190] sm:$0xff]
                  %402 = vst [vmem:[%s350 + $0xc8] sm:$0xff] %v401
                  %v403 = vld [vmem:[%s349 + $0x1a0] sm:$0xff]
                  %404 = vst [vmem:[%s350 + $0xd0] sm:$0xff] %v403
                  %v405 = vld [vmem:[%s349 + $0x1b0] sm:$0xff]
                  %406 = vst [vmem:[%s350 + $0xd8] sm:$0xff] %v405
                  %v407 = vld [vmem:[%s349 + $0x1c0] sm:$0xff]
                  %408 = vst [vmem:[%s350 + $0xe0] sm:$0xff] %v407
                  %v409 = vld [vmem:[%s349 + $0x1d0] sm:$0xff]
                  %410 = vst [vmem:[%s350 + $0xe8] sm:$0xff] %v409
                  %v411 = vld [vmem:[%s349 + $0x1e0] sm:$0xff]
                  %412 = vst [vmem:[%s350 + $0xf0] sm:$0xff] %v411
                  %v413 = vld [vmem:[%s349 + $0x1f0] sm:$0xff]
                  %414 = vst [vmem:[%s350 + $0xf8] sm:$0xff] %v413
                $region52: #{tpu_custom_call.1} parent=46 // loop_footer
                  %s348 = sadd.s32 1, %s344
                $region53: #{tpu_custom_call.1} parent=46 // loop_footer_branch
                  %343 = sbr.rel target = $region49
                $region54: #{tpu_custom_call.1} parent=46 // loop_exit
                  _
              $region47: #{tpu_custom_call.1} parent=31 // pred_fallthru
                _
              // Predicated region
              $region55: #{tpu_custom_call.1} parent=31 // pred_check
                _
              $region56: #{tpu_custom_call.1} parent=31 // pred_check_branch
                %416 = sbr.rel target = $region58
              $region57: #{tpu_custom_call.1} parent=31 // pred_region
                _
              $region58: #{tpu_custom_call.1} parent=31 // pred_fallthru
                _
            $region32: #{tpu_custom_call.1} parent=27 // pred_fallthru
              _
            // Predicated region
            $region33: #{tpu_custom_call.1} parent=27 // pred_check
              _
            $region34: #{tpu_custom_call.1} parent=27 // pred_check_branch
              %267 = sbr.rel target = $region36
            $region35: #{tpu_custom_call.1} parent=27 // pred_region
              loop: start=0, step=1, limit=1
              $region37: #{tpu_custom_call.1} parent=35 // loop_pre_header
                _
              $region38: #{tpu_custom_call.1} parent=35 // loop_header
                %s270 = sphi 0, %s274
                %p271 = scmp.ge.s32.totalorder %s270, 1
                %s275 = sphi %s261, %s261
                %s276 = sphi %s253, %s253
              $region39: #{tpu_custom_call.1} parent=35 // loop_header_branch
                %273 = sbr.rel (%p271) target = $region43
              $region40: #{tpu_custom_call.1} parent=35 // loop_body
                %v277 = vld [vmem:[%s275] sm:$0xff]
                %278 = vst [vmem:[%s276] sm:$0xff] %v277
                %v279 = vld [vmem:[%s275 + $0x10] sm:$0xff]
                %280 = vst [vmem:[%s276 + $0x8] sm:$0xff] %v279
                %v281 = vld [vmem:[%s275 + $0x20] sm:$0xff]
                %282 = vst [vmem:[%s276 + $0x10] sm:$0xff] %v281
                %v283 = vld [vmem:[%s275 + $0x30] sm:$0xff]
                %284 = vst [vmem:[%s276 + $0x18] sm:$0xff] %v283
                %v285 = vld [vmem:[%s275 + $0x40] sm:$0xff]
                %286 = vst [vmem:[%s276 + $0x20] sm:$0xff] %v285
                %v287 = vld [vmem:[%s275 + $0x50] sm:$0xff]
                %288 = vst [vmem:[%s276 + $0x28] sm:$0xff] %v287
                %v289 = vld [vmem:[%s275 + $0x60] sm:$0xff]
                %290 = vst [vmem:[%s276 + $0x30] sm:$0xff] %v289
                %v291 = vld [vmem:[%s275 + $0x70] sm:$0xff]
                %292 = vst [vmem:[%s276 + $0x38] sm:$0xff] %v291
                %v293 = vld [vmem:[%s275 + $0x80] sm:$0xff]
                %294 = vst [vmem:[%s276 + $0x40] sm:$0xff] %v293
                %v295 = vld [vmem:[%s275 + $0x90] sm:$0xff]
                %296 = vst [vmem:[%s276 + $0x48] sm:$0xff] %v295
                %v297 = vld [vmem:[%s275 + $0xa0] sm:$0xff]
                %298 = vst [vmem:[%s276 + $0x50] sm:$0xff] %v297
                %v299 = vld [vmem:[%s275 + $0xb0] sm:$0xff]
                %300 = vst [vmem:[%s276 + $0x58] sm:$0xff] %v299
                %v301 = vld [vmem:[%s275 + $0xc0] sm:$0xff]
                %302 = vst [vmem:[%s276 + $0x60] sm:$0xff] %v301
                %v303 = vld [vmem:[%s275 + $0xd0] sm:$0xff]
                %304 = vst [vmem:[%s276 + $0x68] sm:$0xff] %v303
                %v305 = vld [vmem:[%s275 + $0xe0] sm:$0xff]
                %306 = vst [vmem:[%s276 + $0x70] sm:$0xff] %v305
                %v307 = vld [vmem:[%s275 + $0xf0] sm:$0xff]
                %308 = vst [vmem:[%s276 + $0x78] sm:$0xff] %v307
                %v309 = vld [vmem:[%s275 + $0x100] sm:$0xff]
                %310 = vst [vmem:[%s276 + $0x80] sm:$0xff] %v309
                %v311 = vld [vmem:[%s275 + $0x110] sm:$0xff]
                %312 = vst [vmem:[%s276 + $0x88] sm:$0xff] %v311
                %v313 = vld [vmem:[%s275 + $0x120] sm:$0xff]
                %314 = vst [vmem:[%s276 + $0x90] sm:$0xff] %v313
                %v315 = vld [vmem:[%s275 + $0x130] sm:$0xff]
                %316 = vst [vmem:[%s276 + $0x98] sm:$0xff] %v315
                %v317 = vld [vmem:[%s275 + $0x140] sm:$0xff]
                %318 = vst [vmem:[%s276 + $0xa0] sm:$0xff] %v317
                %v319 = vld [vmem:[%s275 + $0x150] sm:$0xff]
                %320 = vst [vmem:[%s276 + $0xa8] sm:$0xff] %v319
                %v321 = vld [vmem:[%s275 + $0x160] sm:$0xff]
                %322 = vst [vmem:[%s276 + $0xb0] sm:$0xff] %v321
                %v323 = vld [vmem:[%s275 + $0x170] sm:$0xff]
                %324 = vst [vmem:[%s276 + $0xb8] sm:$0xff] %v323
                %v325 = vld [vmem:[%s275 + $0x180] sm:$0xff]
                %326 = vst [vmem:[%s276 + $0xc0] sm:$0xff] %v325
                %v327 = vld [vmem:[%s275 + $0x190] sm:$0xff]
                %328 = vst [vmem:[%s276 + $0xc8] sm:$0xff] %v327
                %v329 = vld [vmem:[%s275 + $0x1a0] sm:$0xff]
                %330 = vst [vmem:[%s276 + $0xd0] sm:$0xff] %v329
                %v331 = vld [vmem:[%s275 + $0x1b0] sm:$0xff]
                %332 = vst [vmem:[%s276 + $0xd8] sm:$0xff] %v331
                %v333 = vld [vmem:[%s275 + $0x1c0] sm:$0xff]
                %334 = vst [vmem:[%s276 + $0xe0] sm:$0xff] %v333
                %v335 = vld [vmem:[%s275 + $0x1d0] sm:$0xff]
                %336 = vst [vmem:[%s276 + $0xe8] sm:$0xff] %v335
                %v337 = vld [vmem:[%s275 + $0x1e0] sm:$0xff]
                %338 = vst [vmem:[%s276 + $0xf0] sm:$0xff] %v337
                %v339 = vld [vmem:[%s275 + $0x1f0] sm:$0xff]
                %340 = vst [vmem:[%s276 + $0xf8] sm:$0xff] %v339
              $region41: #{tpu_custom_call.1} parent=35 // loop_footer
                %s274 = sadd.s32 1, %s270
              $region42: #{tpu_custom_call.1} parent=35 // loop_footer_branch
                %269 = sbr.rel target = $region38
              $region43: #{tpu_custom_call.1} parent=35 // loop_exit
                _
            $region36: #{tpu_custom_call.1} parent=27 // pred_fallthru
              _
          $region28: #{tpu_custom_call.1} parent=23 // pred_fallthru
            _
          %417 = vnop
        $region24: #{tpu_custom_call.1} parent=19 // pred_fallthru
          _
        // Predicated region
        $region59: #{tpu_custom_call.1} parent=19 // pred_check
          %p418 = pneg %p90
        $region60: #{tpu_custom_call.1} parent=19 // pred_check_branch
          %420 = sbr.rel (%p418) target = $region62
        $region61: #{tpu_custom_call.1} parent=19 // pred_region
          %s421 = sand.u32 %s80, 1
          %s422 = scalar_lea.sflag [#allocation5], %s421
          %s423 = sand.u32 %s80, 1
          %s424 = smul.addr %s423, 256
          %s425 = scalar_lea.vmem [#allocation4], %s424
          %s426 = smul.u32 32, %s30
          %s428 = ssub.s32 4096, 4096
          %429 = vsyncadd %s422, %s428
          %s430 = smul.addr %s426, 128
          %s431 = scalar_lea.hbm %s1, %s430
          %s432 = sshll.u32 %s425, 4
          %s433 = int_to_ptr.vmem [resolvable:$true] %s432
          %438 = dma.hbm_to_vmem [thread:$0]  %s431, 4096, %s433, %s422, 128, 128, 8
        $region62: #{tpu_custom_call.1} parent=19 // pred_fallthru
          _
        // Predicated region
        $region63: #{tpu_custom_call.1} parent=19 // pred_check
          %p439 = pneg %p118
        $region64: #{tpu_custom_call.1} parent=19 // pred_check_branch
          %441 = sbr.rel (%p439) target = $region66
        $region65: #{tpu_custom_call.1} parent=19 // pred_region
          %s442 = smul.u32 32, %s30
          %p443 = scmp.lt.s32.totalorder %s29, 2
          %s444 = scalar_select %p443, %s29, 2
          %p445 = scmp.lt.s32.totalorder %s442, 63
          %s446 = scalar_select %p445, %s442, 63
          %s447 = smul.addr %s444, 64
          %s448 = sadd.s32 %s446, %s447
          %s449 = smul.addr %s448, 8
          %s450 = scalar_lea.vmem %s2, %s449
          %s451 = smul.u32 32, %s30
        $region66: #{tpu_custom_call.1} parent=19 // pred_fallthru
          _
        // Predicated region
        $region67: #{tpu_custom_call.1} parent=19 // pred_check
          %p452 = pneg %p146
        $region68: #{tpu_custom_call.1} parent=19 // pred_check_branch
          %454 = sbr.rel (%p452) target = $region70
        $region69: #{tpu_custom_call.1} parent=19 // pred_region
          %s455 = smul.u32 32, %s28
          %p456 = scmp.lt.s32.totalorder %s29, 2
          %s457 = scalar_select %p456, %s29, 2
          %p458 = scmp.lt.s32.totalorder %s455, 63
          %s459 = scalar_select %p458, %s455, 63
          %s460 = smul.addr %s457, 64
          %s461 = sadd.s32 %s459, %s460
          %s462 = smul.addr %s461, 8
          %s463 = scalar_lea.vmem %s3, %s462
          %s464 = smul.u32 32, %s28
        $region70: #{tpu_custom_call.1} parent=19 // pred_fallthru
          _
        // Predicated region
        $region71: #{tpu_custom_call.1} parent=19 // pred_check
          %p465 = pneg %p172
        $region72: #{tpu_custom_call.1} parent=19 // pred_check_branch
          %467 = sbr.rel (%p465) target = $region74
        $region73: #{tpu_custom_call.1} parent=19 // pred_region
          %s468 = sand.u32 %s162, 1
          %s469 = scalar_lea.sflag [#allocation8], %s468
          %s470 = sand.u32 %s162, 1
          %s471 = smul.addr %s470, 64
          %s472 = scalar_lea.vmem [#allocation7], %s471
          %s474 = ssub.s32 1024, 1024
          %475 = vsyncadd %s469, %s474
          %s476 = smul.addr %s29, 16
          %s477 = smul.addr %s476, 64
          %s478 = scalar_lea.hbm %s4, %s477
          %s479 = sshll.u32 %s472, 4
          %s480 = int_to_ptr.vmem [resolvable:$true] %s479
          %485 = dma.hbm_to_vmem [thread:$0]  %s478, 1024, %s480, %s469, 64, 64, 4
        $region74: #{tpu_custom_call.1} parent=19 // pred_fallthru
          _
      $region20: #{tpu_custom_call.1} parent=5 // pred_fallthru
        _
      %p486 = scmp.le.s32.totalorder 1, %s21
      %p487 = scmp.lt.s32.totalorder %s21, 13
      %p488 = pnand %p486, %p487
      %p489 = pneg %p488
      // Predicated region
      $region75: #{tpu_custom_call.1} parent=5 // pred_check
        _
      $region76: #{tpu_custom_call.1} parent=5 // pred_check_branch
        %491 = sbr.rel (%p488) target = $region78
      $region77: #{tpu_custom_call.1} parent=5 // pred_region
        %s492 = ssub.s32 %s21, 1
        %s493 = sand.u32 %s57, 1
        %s494 = sand.u32 %s57, 1
        %s495 = smul.addr %s494, 256
        %s496 = scalar_lea.vmem [#allocation3], %s495
        // Predicated region
        $region79: #{tpu_custom_call.1} parent=77 // pred_check
          %p497 = pneg %p70
        $region80: #{tpu_custom_call.1} parent=77 // pred_check_branch
          %499 = sbr.rel (%p497) target = $region82
        $region81: #{tpu_custom_call.1} parent=77 // pred_region
          _
        $region82: #{tpu_custom_call.1} parent=77 // pred_fallthru
          _
        %s500 = sand.u32 %s83, 1
        %s501 = scalar_lea.sflag [#allocation5], %s500
        %s502 = sand.u32 %s83, 1
        %s503 = smul.addr %s502, 256
        %s504 = scalar_lea.vmem [#allocation4], %s503
        // Predicated region
        $region83: #{tpu_custom_call.1} parent=77 // pred_check
          %p505 = pneg %p96
        $region84: #{tpu_custom_call.1} parent=77 // pred_check_branch
          %507 = sbr.rel (%p505) target = $region86
        $region85: #{tpu_custom_call.1} parent=77 // pred_region
          %508 = dma.done %s501, 4096
        $region86: #{tpu_custom_call.1} parent=77 // pred_fallthru
          _
        %s509 = sand.u32 %s165, 1
        %s510 = scalar_lea.sflag [#allocation8], %s509
        %s511 = sand.u32 %s165, 1
        %s512 = smul.addr %s511, 64
        %s513 = scalar_lea.vmem [#allocation7], %s512
        // Predicated region
        $region87: #{tpu_custom_call.1} parent=77 // pred_check
          %p514 = pneg %p178
        $region88: #{tpu_custom_call.1} parent=77 // pred_check_branch
          %516 = sbr.rel (%p514) target = $region90
        $region89: #{tpu_custom_call.1} parent=77 // pred_region
          %517 = dma.done %s510, 1024
        $region90: #{tpu_custom_call.1} parent=77 // pred_fallthru
          _
        %s518 = sand.u32 %s57, 1
        %s519 = sand.u32 %s57, 1
        %s520 = smul.addr %s519, 256
        %s521 = scalar_lea.vmem [#allocation3], %s520
        %p522 = pneg %p70
        %p523 = pneg %p67
        %s524 = sand.u32 %s83, 1
        %s525 = scalar_lea.sflag [#allocation5], %s524
        %s526 = sand.u32 %s83, 1
        %s527 = smul.addr %s526, 256
        %s528 = scalar_lea.vmem [#allocation4], %s527
        %p529 = pneg %p96
        %p530 = pneg %p93
        %s531 = smul.u32 32, %s33
        %p532 = scmp.lt.s32.totalorder %s32, 2
        %s533 = scalar_select %p532, %s32, 2
        %p534 = scmp.lt.s32.totalorder %s531, 63
        %s535 = scalar_select %p534, %s531, 63
        %s536 = smul.addr %s533, 64
        %s537 = sadd.s32 %s535, %s536
        %s538 = smul.addr %s537, 8
        %s539 = scalar_lea.vmem %s2, %s538
        %p540 = pneg %p124
        %p541 = pneg %p121
        %s542 = smul.u32 32, %s31
        %p543 = scmp.lt.s32.totalorder %s32, 2
        %s544 = scalar_select %p543, %s32, 2
        %p545 = scmp.lt.s32.totalorder %s542, 63
        %s546 = scalar_select %p545, %s542, 63
        %s547 = smul.addr %s544, 64
        %s548 = sadd.s32 %s546, %s547
        %s549 = smul.addr %s548, 8
        %s550 = scalar_lea.vmem %s3, %s549
        %p551 = pneg %p152
        %p552 = pneg %p149
        %s553 = sand.u32 %s165, 1
        %s554 = scalar_lea.sflag [#allocation8], %s553
        %s555 = sand.u32 %s165, 1
        %s556 = smul.addr %s555, 64
        %s557 = scalar_lea.vmem [#allocation7], %s556
        %p558 = pneg %p178
        %p559 = pneg %p175
        %p560 = pneg %p199
        %p561 = pneg %p196
        %p562 = pneg %p225
        %p563 = pneg %p222
        %s564 = sand.u32 %s212, 1
        %s565 = scalar_lea.sflag [#allocation6], %s564
        %s566 = sand.u32 %s212, 1
        %s567 = smul.addr %s566, 256
        %s568 = scalar_lea.vmem [#allocation9], %s567
        %s569 = smul.u32 32, %s31
        %s570 = smul.u32 2, %s33
        %s571 = smul.u32 32, %s33
        %s572 = smul.u32 32, %s33
        %p573 = scmp.lt.s32.totalorder %s32, 2
        %s574 = scalar_select %p573, %s32, 2
        %p575 = scmp.lt.s32.totalorder %s572, 63
        %s576 = scalar_select %p575, %s572, 63
        %s577 = smul.addr %s574, 64
        %s578 = sadd.s32 %s576, %s577
        %s579 = smul.addr %s578, 8
        %s580 = scalar_lea.vmem %s2, %s579
        %s581 = smul.u32 32, %s33
        %s582 = smul.u32 32, %s31
        %p583 = scmp.lt.s32.totalorder %s32, 2
        %s584 = scalar_select %p583, %s32, 2
        %p585 = scmp.lt.s32.totalorder %s582, 63
        %s586 = scalar_select %p585, %s582, 63
        %s587 = smul.addr %s584, 64
        %s588 = sadd.s32 %s586, %s587
        %s589 = smul.addr %s588, 8
        %s590 = scalar_lea.vmem %s3, %s589
        %s591 = smul.u32 32, %s31
        %s592 = smul.u32 32, %s31
        %p594 = scmp.eq.s32.totalorder %s32, 0
        %p595 = scmp.eq.s32.totalorder %s33, 0
        %p596 = pnand %p594, %p595
        %p597 = pneg %p596
        // Predicated region
        $region91: #{tpu_custom_call.1} parent=77 // pred_check
          _
        $region92: #{tpu_custom_call.1} parent=77 // pred_check_branch
          %599 = sbr.rel (%p596) target = $region94
        $region93: #{tpu_custom_call.1} parent=77 // pred_region
          %600 = vst [vmem:[%s568] sm:$0xff] 0.0
          %601 = vst [vmem:[%s568 + $0x8] sm:$0xff] 0.0
          %602 = vst [vmem:[%s568 + $0x10] sm:$0xff] 0.0
          %603 = vst [vmem:[%s568 + $0x18] sm:$0xff] 0.0
          %604 = vst [vmem:[%s568 + $0x20] sm:$0xff] 0.0
          %605 = vst [vmem:[%s568 + $0x28] sm:$0xff] 0.0
          %606 = vst [vmem:[%s568 + $0x30] sm:$0xff] 0.0
          %607 = vst [vmem:[%s568 + $0x38] sm:$0xff] 0.0
          %608 = vst [vmem:[%s568 + $0x40] sm:$0xff] 0.0
          %609 = vst [vmem:[%s568 + $0x48] sm:$0xff] 0.0
          %610 = vst [vmem:[%s568 + $0x50] sm:$0xff] 0.0
          %611 = vst [vmem:[%s568 + $0x58] sm:$0xff] 0.0
          %612 = vst [vmem:[%s568 + $0x60] sm:$0xff] 0.0
          %613 = vst [vmem:[%s568 + $0x68] sm:$0xff] 0.0
          %614 = vst [vmem:[%s568 + $0x70] sm:$0xff] 0.0
          %615 = vst [vmem:[%s568 + $0x78] sm:$0xff] 0.0
          %616 = vst [vmem:[%s568 + $0x80] sm:$0xff] 0.0
          %617 = vst [vmem:[%s568 + $0x88] sm:$0xff] 0.0
          %618 = vst [vmem:[%s568 + $0x90] sm:$0xff] 0.0
          %619 = vst [vmem:[%s568 + $0x98] sm:$0xff] 0.0
          %620 = vst [vmem:[%s568 + $0xa0] sm:$0xff] 0.0
          %621 = vst [vmem:[%s568 + $0xa8] sm:$0xff] 0.0
          %622 = vst [vmem:[%s568 + $0xb0] sm:$0xff] 0.0
          %623 = vst [vmem:[%s568 + $0xb8] sm:$0xff] 0.0
          %624 = vst [vmem:[%s568 + $0xc0] sm:$0xff] 0.0
          %625 = vst [vmem:[%s568 + $0xc8] sm:$0xff] 0.0
          %626 = vst [vmem:[%s568 + $0xd0] sm:$0xff] 0.0
          %627 = vst [vmem:[%s568 + $0xd8] sm:$0xff] 0.0
          %628 = vst [vmem:[%s568 + $0xe0] sm:$0xff] 0.0
          %629 = vst [vmem:[%s568 + $0xe8] sm:$0xff] 0.0
          %630 = vst [vmem:[%s568 + $0xf0] sm:$0xff] 0.0
          %631 = vst [vmem:[%s568 + $0xf8] sm:$0xff] 0.0
        $region94: #{tpu_custom_call.1} parent=77 // pred_fallthru
          _
        // Predicated region
        $region95: #{tpu_custom_call.1} parent=77 // pred_check
          %p632 = pneg %p595
        $region96: #{tpu_custom_call.1} parent=77 // pred_check_branch
          %634 = sbr.rel (%p632) target = $region98
        $region97: #{tpu_custom_call.1} parent=77 // pred_region
          %635 = vst [vmem:[#allocation2] sm:$0xff] 0.0
          %636 = vst [vmem:[#allocation2 + $0x8] sm:$0xff] 0.0
          %637 = vst [vmem:[#allocation2 + $0x10] sm:$0xff] 0.0
          %638 = vst [vmem:[#allocation2 + $0x18] sm:$0xff] 0.0
          %639 = vst [vmem:[#allocation2 + $0x20] sm:$0xff] 0.0
          %640 = vst [vmem:[#allocation2 + $0x28] sm:$0xff] 0.0
          %641 = vst [vmem:[#allocation2 + $0x30] sm:$0xff] 0.0
          %642 = vst [vmem:[#allocation2 + $0x38] sm:$0xff] 0.0
          %643 = vst [vmem:[#allocation2 + $0x40] sm:$0xff] 0.0
          %644 = vst [vmem:[#allocation2 + $0x48] sm:$0xff] 0.0
          %645 = vst [vmem:[#allocation2 + $0x50] sm:$0xff] 0.0
          %646 = vst [vmem:[#allocation2 + $0x58] sm:$0xff] 0.0
          %647 = vst [vmem:[#allocation2 + $0x60] sm:$0xff] 0.0
          %648 = vst [vmem:[#allocation2 + $0x68] sm:$0xff] 0.0
          %649 = vst [vmem:[#allocation2 + $0x70] sm:$0xff] 0.0
          %650 = vst [vmem:[#allocation2 + $0x78] sm:$0xff] 0.0
          %651 = vst [vmem:[#allocation2 + $0x80] sm:$0xff] 0.0
          %652 = vst [vmem:[#allocation2 + $0x88] sm:$0xff] 0.0
          %653 = vst [vmem:[#allocation2 + $0x90] sm:$0xff] 0.0
          %654 = vst [vmem:[#allocation2 + $0x98] sm:$0xff] 0.0
          %655 = vst [vmem:[#allocation2 + $0xa0] sm:$0xff] 0.0
          %656 = vst [vmem:[#allocation2 + $0xa8] sm:$0xff] 0.0
          %657 = vst [vmem:[#allocation2 + $0xb0] sm:$0xff] 0.0
          %658 = vst [vmem:[#allocation2 + $0xb8] sm:$0xff] 0.0
          %659 = vst [vmem:[#allocation2 + $0xc0] sm:$0xff] 0.0
          %660 = vst [vmem:[#allocation2 + $0xc8] sm:$0xff] 0.0
          %661 = vst [vmem:[#allocation2 + $0xd0] sm:$0xff] 0.0
          %662 = vst [vmem:[#allocation2 + $0xd8] sm:$0xff] 0.0
          %663 = vst [vmem:[#allocation2 + $0xe0] sm:$0xff] 0.0
          %664 = vst [vmem:[#allocation2 + $0xe8] sm:$0xff] 0.0
          %665 = vst [vmem:[#allocation2 + $0xf0] sm:$0xff] 0.0
          %666 = vst [vmem:[#allocation2 + $0xf8] sm:$0xff] 0.0
        $region98: #{tpu_custom_call.1} parent=77 // pred_fallthru
          _
        %v667 = vld [vmem:[%s504] sm:$0xff]
        %v668 = vld [vmem:[%s504 + $0x8] sm:$0xff]
        %v669 = vld [vmem:[%s504 + $0x10] sm:$0xff]
        %v670 = vld [vmem:[%s504 + $0x18] sm:$0xff]
        %v671 = vld [vmem:[%s504 + $0x20] sm:$0xff]
        %v672 = vld [vmem:[%s504 + $0x28] sm:$0xff]
        %v673 = vld [vmem:[%s504 + $0x30] sm:$0xff]
        %v674 = vld [vmem:[%s504 + $0x38] sm:$0xff]
        %v675 = vld [vmem:[%s504 + $0x40] sm:$0xff]
        %v676 = vld [vmem:[%s504 + $0x48] sm:$0xff]
        %v677 = vld [vmem:[%s504 + $0x50] sm:$0xff]
        %v678 = vld [vmem:[%s504 + $0x58] sm:$0xff]
        %v679 = vld [vmem:[%s504 + $0x60] sm:$0xff]
        %v680 = vld [vmem:[%s504 + $0x68] sm:$0xff]
        %v681 = vld [vmem:[%s504 + $0x70] sm:$0xff]
        %v682 = vld [vmem:[%s504 + $0x78] sm:$0xff]
        %v683 = vld [vmem:[%s504 + $0x80] sm:$0xff]
        %v684 = vld [vmem:[%s504 + $0x88] sm:$0xff]
        %v685 = vld [vmem:[%s504 + $0x90] sm:$0xff]
        %v686 = vld [vmem:[%s504 + $0x98] sm:$0xff]
        %v687 = vld [vmem:[%s504 + $0xa0] sm:$0xff]
        %v688 = vld [vmem:[%s504 + $0xa8] sm:$0xff]
        %v689 = vld [vmem:[%s504 + $0xb0] sm:$0xff]
        %v690 = vld [vmem:[%s504 + $0xb8] sm:$0xff]
        %v691 = vld [vmem:[%s504 + $0xc0] sm:$0xff]
        %v692 = vld [vmem:[%s504 + $0xc8] sm:$0xff]
        %v693 = vld [vmem:[%s504 + $0xd0] sm:$0xff]
        %v694 = vld [vmem:[%s504 + $0xd8] sm:$0xff]
        %v695 = vld [vmem:[%s504 + $0xe0] sm:$0xff]
        %v696 = vld [vmem:[%s504 + $0xe8] sm:$0xff]
        %v697 = vld [vmem:[%s504 + $0xf0] sm:$0xff]
        %v698 = vld [vmem:[%s504 + $0xf8] sm:$0xff]
        %v699 = vld [vmem:[%s580] sm:$0xff]
        %v700 = vld [vmem:[%s580 + $0x8] sm:$0xff]
        %v701 = vld [vmem:[%s580 + $0x10] sm:$0xff]
        %v702 = vld [vmem:[%s580 + $0x18] sm:$0xff]
        %v703 = vld [vmem:[%s580 + $0x20] sm:$0xff]
        %v704 = vld [vmem:[%s580 + $0x28] sm:$0xff]
        %v705 = vld [vmem:[%s580 + $0x30] sm:$0xff]
        %v706 = vld [vmem:[%s580 + $0x38] sm:$0xff]
        %v707 = vld [vmem:[%s580 + $0x40] sm:$0xff]
        %v708 = vld [vmem:[%s580 + $0x48] sm:$0xff]
        %v709 = vld [vmem:[%s580 + $0x50] sm:$0xff]
        %v710 = vld [vmem:[%s580 + $0x58] sm:$0xff]
        %v711 = vld [vmem:[%s580 + $0x60] sm:$0xff]
        %v712 = vld [vmem:[%s580 + $0x68] sm:$0xff]
        %v713 = vld [vmem:[%s580 + $0x70] sm:$0xff]
        %v714 = vld [vmem:[%s580 + $0x78] sm:$0xff]
        %v715 = vld [vmem:[%s580 + $0x80] sm:$0xff]
        %v716 = vld [vmem:[%s580 + $0x88] sm:$0xff]
        %v717 = vld [vmem:[%s580 + $0x90] sm:$0xff]
        %v718 = vld [vmem:[%s580 + $0x98] sm:$0xff]
        %v719 = vld [vmem:[%s580 + $0xa0] sm:$0xff]
        %v720 = vld [vmem:[%s580 + $0xa8] sm:$0xff]
        %v721 = vld [vmem:[%s580 + $0xb0] sm:$0xff]
        %v722 = vld [vmem:[%s580 + $0xb8] sm:$0xff]
        %v723 = vld [vmem:[%s580 + $0xc0] sm:$0xff]
        %v724 = vld [vmem:[%s580 + $0xc8] sm:$0xff]
        %v725 = vld [vmem:[%s580 + $0xd0] sm:$0xff]
        %v726 = vld [vmem:[%s580 + $0xd8] sm:$0xff]
        %v727 = vld [vmem:[%s580 + $0xe0] sm:$0xff]
        %v728 = vld [vmem:[%s580 + $0xe8] sm:$0xff]
        %v729 = vld [vmem:[%s580 + $0xf0] sm:$0xff]
        %v730 = vld [vmem:[%s580 + $0xf8] sm:$0xff]
        %732 = vset.pattern.permute.xlu0 0
        %733 = vperm.xlu0 %732, %v699
        %v734 = vpop.permute.xlu0 %733
        %737 = vset.pattern.permute.xlu0 0
        %738 = vperm.xlu0 %737, %v700
        %v739 = vpop.permute.xlu0 %738
        %742 = vset.pattern.permute.xlu0 0
        %743 = vperm.xlu0 %742, %v701
        %v744 = vpop.permute.xlu0 %743
        %747 = vset.pattern.permute.xlu0 0
        %748 = vperm.xlu0 %747, %v702
        %v749 = vpop.permute.xlu0 %748
        %752 = vset.pattern.permute.xlu0 0
        %753 = vperm.xlu0 %752, %v703
        %v754 = vpop.permute.xlu0 %753
        %757 = vset.pattern.permute.xlu0 0
        %758 = vperm.xlu0 %757, %v704
        %v759 = vpop.permute.xlu0 %758
        %762 = vset.pattern.permute.xlu0 0
        %763 = vperm.xlu0 %762, %v705
        %v764 = vpop.permute.xlu0 %763
        %767 = vset.pattern.permute.xlu0 0
        %768 = vperm.xlu0 %767, %v706
        %v769 = vpop.permute.xlu0 %768
        %772 = vset.pattern.permute.xlu0 0
        %773 = vperm.xlu0 %772, %v707
        %v774 = vpop.permute.xlu0 %773
        %777 = vset.pattern.permute.xlu0 0
        %778 = vperm.xlu0 %777, %v708
        %v779 = vpop.permute.xlu0 %778
        %782 = vset.pattern.permute.xlu0 0
        %783 = vperm.xlu0 %782, %v709
        %v784 = vpop.permute.xlu0 %783
        %787 = vset.pattern.permute.xlu0 0
        %788 = vperm.xlu0 %787, %v710
        %v789 = vpop.permute.xlu0 %788
        %792 = vset.pattern.permute.xlu0 0
        %793 = vperm.xlu0 %792, %v711
        %v794 = vpop.permute.xlu0 %793
        %797 = vset.pattern.permute.xlu0 0
        %798 = vperm.xlu0 %797, %v712
        %v799 = vpop.permute.xlu0 %798
        %802 = vset.pattern.permute.xlu0 0
        %803 = vperm.xlu0 %802, %v713
        %v804 = vpop.permute.xlu0 %803
        %807 = vset.pattern.permute.xlu0 0
        %808 = vperm.xlu0 %807, %v714
        %v809 = vpop.permute.xlu0 %808
        %812 = vset.pattern.permute.xlu0 0
        %813 = vperm.xlu0 %812, %v715
        %v814 = vpop.permute.xlu0 %813
        %817 = vset.pattern.permute.xlu0 0
        %818 = vperm.xlu0 %817, %v716
        %v819 = vpop.permute.xlu0 %818
        %822 = vset.pattern.permute.xlu0 0
        %823 = vperm.xlu0 %822, %v717
        %v824 = vpop.permute.xlu0 %823
        %827 = vset.pattern.permute.xlu0 0
        %828 = vperm.xlu0 %827, %v718
        %v829 = vpop.permute.xlu0 %828
        %832 = vset.pattern.permute.xlu0 0
        %833 = vperm.xlu0 %832, %v719
        %v834 = vpop.permute.xlu0 %833
        %837 = vset.pattern.permute.xlu0 0
        %838 = vperm.xlu0 %837, %v720
        %v839 = vpop.permute.xlu0 %838
        %842 = vset.pattern.permute.xlu0 0
        %843 = vperm.xlu0 %842, %v721
        %v844 = vpop.permute.xlu0 %843
        %847 = vset.pattern.permute.xlu0 0
        %848 = vperm.xlu0 %847, %v722
        %v849 = vpop.permute.xlu0 %848
        %852 = vset.pattern.permute.xlu0 0
        %853 = vperm.xlu0 %852, %v723
        %v854 = vpop.permute.xlu0 %853
        %857 = vset.pattern.permute.xlu0 0
        %858 = vperm.xlu0 %857, %v724
        %v859 = vpop.permute.xlu0 %858
        %862 = vset.pattern.permute.xlu0 0
        %863 = vperm.xlu0 %862, %v725
        %v864 = vpop.permute.xlu0 %863
        %867 = vset.pattern.permute.xlu0 0
        %868 = vperm.xlu0 %867, %v726
        %v869 = vpop.permute.xlu0 %868
        %872 = vset.pattern.permute.xlu0 0
        %873 = vperm.xlu0 %872, %v727
        %v874 = vpop.permute.xlu0 %873
        %877 = vset.pattern.permute.xlu0 0
        %878 = vperm.xlu0 %877, %v728
        %v879 = vpop.permute.xlu0 %878
        %882 = vset.pattern.permute.xlu0 0
        %883 = vperm.xlu0 %882, %v729
        %v884 = vpop.permute.xlu0 %883
        %887 = vset.pattern.permute.xlu0 0
        %888 = vperm.xlu0 %887, %v730
        %v889 = vpop.permute.xlu0 %888
        %v891 = vmul.f32 %v667, %v734
        %v892 = vmul.f32 %v668, %v739
        %v893 = vmul.f32 %v669, %v744
        %v894 = vmul.f32 %v670, %v749
        %v895 = vmul.f32 %v671, %v754
        %v896 = vmul.f32 %v672, %v759
        %v897 = vmul.f32 %v673, %v764
        %v898 = vmul.f32 %v674, %v769
        %v899 = vmul.f32 %v675, %v774
        %v900 = vmul.f32 %v676, %v779
        %v901 = vmul.f32 %v677, %v784
        %v902 = vmul.f32 %v678, %v789
        %v903 = vmul.f32 %v679, %v794
        %v904 = vmul.f32 %v680, %v799
        %v905 = vmul.f32 %v681, %v804
        %v906 = vmul.f32 %v682, %v809
        %v907 = vmul.f32 %v683, %v814
        %v908 = vmul.f32 %v684, %v819
        %v909 = vmul.f32 %v685, %v824
        %v910 = vmul.f32 %v686, %v829
        %v911 = vmul.f32 %v687, %v834
        %v912 = vmul.f32 %v688, %v839
        %v913 = vmul.f32 %v689, %v844
        %v914 = vmul.f32 %v690, %v849
        %v915 = vmul.f32 %v691, %v854
        %v916 = vmul.f32 %v692, %v859
        %v917 = vmul.f32 %v693, %v864
        %v918 = vmul.f32 %v694, %v869
        %v919 = vmul.f32 %v695, %v874
        %v920 = vmul.f32 %v696, %v879
        %v921 = vmul.f32 %v697, %v884
        %v922 = vmul.f32 %v698, %v889
        %v923 = vpack.c.bf16 %v892, %v891
        %v924 = vpack.c.bf16 %v894, %v893
        %v925 = vpack.c.bf16 %v896, %v895
        %v926 = vpack.c.bf16 %v898, %v897
        %v927 = vpack.c.bf16 %v900, %v899
        %v928 = vpack.c.bf16 %v902, %v901
        %v929 = vpack.c.bf16 %v904, %v903
        %v930 = vpack.c.bf16 %v906, %v905
        %v931 = vpack.c.bf16 %v908, %v907
        %v932 = vpack.c.bf16 %v910, %v909
        %v933 = vpack.c.bf16 %v912, %v911
        %v934 = vpack.c.bf16 %v914, %v913
        %v935 = vpack.c.bf16 %v916, %v915
        %v936 = vpack.c.bf16 %v918, %v917
        %v937 = vpack.c.bf16 %v920, %v919
        %v938 = vpack.c.bf16 %v922, %v921
        %v939 = vld [vmem:[#allocation2] sm:$0xff]
        %v940 = vld [vmem:[#allocation2 + $0x8] sm:$0xff]
        %v941 = vld [vmem:[#allocation2 + $0x10] sm:$0xff]
        %v942 = vld [vmem:[#allocation2 + $0x18] sm:$0xff]
        %v943 = vld [vmem:[#allocation2 + $0x20] sm:$0xff]
        %v944 = vld [vmem:[#allocation2 + $0x28] sm:$0xff]
        %v945 = vld [vmem:[#allocation2 + $0x30] sm:$0xff]
        %v946 = vld [vmem:[#allocation2 + $0x38] sm:$0xff]
        %v947 = vld [vmem:[#allocation2 + $0x40] sm:$0xff]
        %v948 = vld [vmem:[#allocation2 + $0x48] sm:$0xff]
        %v949 = vld [vmem:[#allocation2 + $0x50] sm:$0xff]
        %v950 = vld [vmem:[#allocation2 + $0x58] sm:$0xff]
        %v951 = vld [vmem:[#allocation2 + $0x60] sm:$0xff]
        %v952 = vld [vmem:[#allocation2 + $0x68] sm:$0xff]
        %v953 = vld [vmem:[#allocation2 + $0x70] sm:$0xff]
        %v954 = vld [vmem:[#allocation2 + $0x78] sm:$0xff]
        %v955 = vld [vmem:[#allocation2 + $0x80] sm:$0xff]
        %v956 = vld [vmem:[#allocation2 + $0x88] sm:$0xff]
        %v957 = vld [vmem:[#allocation2 + $0x90] sm:$0xff]
        %v958 = vld [vmem:[#allocation2 + $0x98] sm:$0xff]
        %v959 = vld [vmem:[#allocation2 + $0xa0] sm:$0xff]
        %v960 = vld [vmem:[#allocation2 + $0xa8] sm:$0xff]
        %v961 = vld [vmem:[#allocation2 + $0xb0] sm:$0xff]
        %v962 = vld [vmem:[#allocation2 + $0xb8] sm:$0xff]
        %v963 = vld [vmem:[#allocation2 + $0xc0] sm:$0xff]
        %v964 = vld [vmem:[#allocation2 + $0xc8] sm:$0xff]
        %v965 = vld [vmem:[#allocation2 + $0xd0] sm:$0xff]
        %v966 = vld [vmem:[#allocation2 + $0xd8] sm:$0xff]
        %v967 = vld [vmem:[#allocation2 + $0xe0] sm:$0xff]
        %v968 = vld [vmem:[#allocation2 + $0xe8] sm:$0xff]
        %v969 = vld [vmem:[#allocation2 + $0xf0] sm:$0xff]
        %v970 = vld [vmem:[#allocation2 + $0xf8] sm:$0xff]
        %v971 = vld [vmem:[%s496] sm:$0xff]
        %v972 = vld [vmem:[%s496 + $0x8] sm:$0xff]
        %v973 = vld [vmem:[%s496 + $0x10] sm:$0xff]
        %v974 = vld [vmem:[%s496 + $0x18] sm:$0xff]
        %v975 = vld [vmem:[%s496 + $0x20] sm:$0xff]
        %v976 = vld [vmem:[%s496 + $0x28] sm:$0xff]
        %v977 = vld [vmem:[%s496 + $0x30] sm:$0xff]
        %v978 = vld [vmem:[%s496 + $0x38] sm:$0xff]
        %v979 = vld [vmem:[%s496 + $0x40] sm:$0xff]
        %v980 = vld [vmem:[%s496 + $0x48] sm:$0xff]
        %v981 = vld [vmem:[%s496 + $0x50] sm:$0xff]
        %v982 = vld [vmem:[%s496 + $0x58] sm:$0xff]
        %v983 = vld [vmem:[%s496 + $0x60] sm:$0xff]
        %v984 = vld [vmem:[%s496 + $0x68] sm:$0xff]
        %v985 = vld [vmem:[%s496 + $0x70] sm:$0xff]
        %v986 = vld [vmem:[%s496 + $0x78] sm:$0xff]
        %v987 = vld [vmem:[%s496 + $0x80] sm:$0xff]
        %v988 = vld [vmem:[%s496 + $0x88] sm:$0xff]
        %v989 = vld [vmem:[%s496 + $0x90] sm:$0xff]
        %v990 = vld [vmem:[%s496 + $0x98] sm:$0xff]
        %v991 = vld [vmem:[%s496 + $0xa0] sm:$0xff]
        %v992 = vld [vmem:[%s496 + $0xa8] sm:$0xff]
        %v993 = vld [vmem:[%s496 + $0xb0] sm:$0xff]
        %v994 = vld [vmem:[%s496 + $0xb8] sm:$0xff]
        %v995 = vld [vmem:[%s496 + $0xc0] sm:$0xff]
        %v996 = vld [vmem:[%s496 + $0xc8] sm:$0xff]
        %v997 = vld [vmem:[%s496 + $0xd0] sm:$0xff]
        %v998 = vld [vmem:[%s496 + $0xd8] sm:$0xff]
        %v999 = vld [vmem:[%s496 + $0xe0] sm:$0xff]
        %v1000 = vld [vmem:[%s496 + $0xe8] sm:$0xff]
        %v1001 = vld [vmem:[%s496 + $0xf0] sm:$0xff]
        %v1002 = vld [vmem:[%s496 + $0xf8] sm:$0xff]
        %v1035 = vunpack.c.l.b16 %v971
        %v1036 = vunpack.c.h.b16 %v971
        %v1037 = vunpack.c.l.b16 %v972
        %v1038 = vunpack.c.h.b16 %v972
        %v1039 = vunpack.c.l.b16 %v973
        %v1040 = vunpack.c.h.b16 %v973
        %v1041 = vunpack.c.l.b16 %v974
        %v1042 = vunpack.c.h.b16 %v974
        %v1043 = vunpack.c.l.b16 %v975
        %v1044 = vunpack.c.h.b16 %v975
        %v1045 = vunpack.c.l.b16 %v976
        %v1046 = vunpack.c.h.b16 %v976
        %v1047 = vunpack.c.l.b16 %v977
        %v1048 = vunpack.c.h.b16 %v977
        %v1049 = vunpack.c.l.b16 %v978
        %v1050 = vunpack.c.h.b16 %v978
        %v1051 = vunpack.c.l.b16 %v979
        %v1052 = vunpack.c.h.b16 %v979
        %v1053 = vunpack.c.l.b16 %v980
        %v1054 = vunpack.c.h.b16 %v980
        %v1055 = vunpack.c.l.b16 %v981
        %v1056 = vunpack.c.h.b16 %v981
        %v1057 = vunpack.c.l.b16 %v982
        %v1058 = vunpack.c.h.b16 %v982
        %v1059 = vunpack.c.l.b16 %v983
        %v1060 = vunpack.c.h.b16 %v983
        %v1061 = vunpack.c.l.b16 %v984
        %v1062 = vunpack.c.h.b16 %v984
        %v1063 = vunpack.c.l.b16 %v985
        %v1064 = vunpack.c.h.b16 %v985
        %v1065 = vunpack.c.l.b16 %v986
        %v1066 = vunpack.c.h.b16 %v986
        %v1067 = vunpack.c.l.b16 %v987
        %v1068 = vunpack.c.h.b16 %v987
        %v1069 = vunpack.c.l.b16 %v988
        %v1070 = vunpack.c.h.b16 %v988
        %v1071 = vunpack.c.l.b16 %v989
        %v1072 = vunpack.c.h.b16 %v989
        %v1073 = vunpack.c.l.b16 %v990
        %v1074 = vunpack.c.h.b16 %v990
        %v1075 = vunpack.c.l.b16 %v991
        %v1076 = vunpack.c.h.b16 %v991
        %v1077 = vunpack.c.l.b16 %v992
        %v1078 = vunpack.c.h.b16 %v992
        %v1079 = vunpack.c.l.b16 %v993
        %v1080 = vunpack.c.h.b16 %v993
        %v1081 = vunpack.c.l.b16 %v994
        %v1082 = vunpack.c.h.b16 %v994
        %v1083 = vunpack.c.l.b16 %v995
        %v1084 = vunpack.c.h.b16 %v995
        %v1085 = vunpack.c.l.b16 %v996
        %v1086 = vunpack.c.h.b16 %v996
        %v1087 = vunpack.c.l.b16 %v997
        %v1088 = vunpack.c.h.b16 %v997
        %v1089 = vunpack.c.l.b16 %v998
        %v1090 = vunpack.c.h.b16 %v998
        %v1091 = vunpack.c.l.b16 %v999
        %v1092 = vunpack.c.h.b16 %v999
        %v1093 = vunpack.c.l.b16 %v1000
        %v1094 = vunpack.c.h.b16 %v1000
        %v1095 = vunpack.c.l.b16 %v1001
        %v1096 = vunpack.c.h.b16 %v1001
        %v1097 = vunpack.c.l.b16 %v1002
        %v1098 = vunpack.c.h.b16 %v1002
        %v1099 = vpack.c.b16 %v1037, %v1035
        %v1100 = vpack.c.b16 %v1038, %v1036
        %v1101 = vpack.c.b16 %v1041, %v1039
        %v1102 = vpack.c.b16 %v1042, %v1040
        %v1103 = vpack.c.b16 %v1045, %v1043
        %v1104 = vpack.c.b16 %v1046, %v1044
        %v1105 = vpack.c.b16 %v1049, %v1047
        %v1106 = vpack.c.b16 %v1050, %v1048
        %v1107 = vpack.c.b16 %v1053, %v1051
        %v1108 = vpack.c.b16 %v1054, %v1052
        %v1109 = vpack.c.b16 %v1057, %v1055
        %v1110 = vpack.c.b16 %v1058, %v1056
        %v1111 = vpack.c.b16 %v1061, %v1059
        %v1112 = vpack.c.b16 %v1062, %v1060
        %v1113 = vpack.c.b16 %v1065, %v1063
        %v1114 = vpack.c.b16 %v1066, %v1064
        %v1115 = vpack.c.b16 %v1069, %v1067
        %v1116 = vpack.c.b16 %v1070, %v1068
        %v1117 = vpack.c.b16 %v1073, %v1071
        %v1118 = vpack.c.b16 %v1074, %v1072
        %v1119 = vpack.c.b16 %v1077, %v1075
        %v1120 = vpack.c.b16 %v1078, %v1076
        %v1121 = vpack.c.b16 %v1081, %v1079
        %v1122 = vpack.c.b16 %v1082, %v1080
        %v1123 = vpack.c.b16 %v1085, %v1083
        %v1124 = vpack.c.b16 %v1086, %v1084
        %v1125 = vpack.c.b16 %v1089, %v1087
        %v1126 = vpack.c.b16 %v1090, %v1088
        %v1127 = vpack.c.b16 %v1093, %v1091
        %v1128 = vpack.c.b16 %v1094, %v1092
        %v1129 = vpack.c.b16 %v1097, %v1095
        %v1130 = vpack.c.b16 %v1098, %v1096
        %1163 = vmatprep.subr.bf16.mxu0 0
        %1164 = vmatpush1.bf16.msra.mxu0 %v923
        %1165 = vmatprep.subr.bf16.mxu0 0
        %1166 = vmatpush1.bf16.msra.mxu0 %v924
        %1167 = vmatprep.subr.bf16.mxu0 0
        %1168 = vmatpush1.bf16.msra.mxu0 %v925
        %1169 = vmatprep.subr.bf16.mxu0 0
        %1170 = vmatpush1.bf16.msra.mxu0 %v926
        %1171 = vmatprep.subr.bf16.mxu0 0
        %1172 = vmatpush1.bf16.msra.mxu0 %v927
        %1173 = vmatprep.subr.bf16.mxu0 0
        %1174 = vmatpush1.bf16.msra.mxu0 %v928
        %1175 = vmatprep.subr.bf16.mxu0 0
        %1176 = vmatpush1.bf16.msra.mxu0 %v929
        %1177 = vmatprep.subr.bf16.mxu0 0
        %1178 = vmatpush1.bf16.msra.mxu0 %v930
        %1179 = vmatprep.subr.bf16.mxu0 0
        %1180 = vmatpush1.bf16.msra.mxu0 %v931
        %1181 = vmatprep.subr.bf16.mxu0 0
        %1182 = vmatpush1.bf16.msra.mxu0 %v932
        %1183 = vmatprep.subr.bf16.mxu0 0
        %1184 = vmatpush1.bf16.msra.mxu0 %v933
        %1185 = vmatprep.subr.bf16.mxu0 0
        %1186 = vmatpush1.bf16.msra.mxu0 %v934
        %1187 = vmatprep.subr.bf16.mxu0 0
        %1188 = vmatpush1.bf16.msra.mxu0 %v935
        %1189 = vmatprep.subr.bf16.mxu0 0
        %1190 = vmatpush1.bf16.msra.mxu0 %v936
        %1191 = vmatprep.subr.bf16.mxu0 0
        %1192 = vmatpush1.bf16.msra.mxu0 %v937
        %1193 = vmatprep.subr.bf16.mxu0 0
        %1194 = vmatpush1.bf16.msra.mxu0 %v938
        %1195 = vmatprep.mubr.bf16.mxu0 %v1100
        %1196 = vmatmul.mubr.bf16.gmra.mrb[0].mxu0 %v1099
        %v1197 = vpop.f32.mrb[0].mxu0
        %v1198 = vadd.f32 0.0, %v1197
        %v1199 = vpop.f32.mrb[0].mxu0
        %v1200 = vpop.f32.mrb[0].mxu0
        %v1201 = vadd.f32 0.0, %v1200
        %v1202 = vpop.f32.mrb[0].mxu0
        %1203 = vmatprep.mubr.bf16.mxu0 %v1102
        %1204 = vmatmul.mubr.bf16.gmra.mrb[0].mxu0 %v1101
        %v1205 = vpop.f32.mrb[0].mxu0
        %v1206 = vadd.f32 0.0, %v1205
        %v1207 = vpop.f32.mrb[0].mxu0
        %v1208 = vpop.f32.mrb[0].mxu0
        %v1209 = vadd.f32 0.0, %v1208
        %v1210 = vpop.f32.mrb[0].mxu0
        %1211 = vmatprep.mubr.bf16.mxu0 %v1104
        %1212 = vmatmul.mubr.bf16.gmra.mrb[0].mxu0 %v1103
        %v1213 = vpop.f32.mrb[0].mxu0
        %v1214 = vadd.f32 0.0, %v1213
        %v1215 = vpop.f32.mrb[0].mxu0
        %v1216 = vpop.f32.mrb[0].mxu0
        %v1217 = vadd.f32 0.0, %v1216
        %v1218 = vpop.f32.mrb[0].mxu0
        %1219 = vmatprep.mubr.bf16.mxu0 %v1106
        %1220 = vmatmul.mubr.bf16.gmra.mrb[0].mxu0 %v1105
        %v1221 = vpop.f32.mrb[0].mxu0
        %v1222 = vadd.f32 0.0, %v1221
        %v1223 = vpop.f32.mrb[0].mxu0
        %v1224 = vpop.f32.mrb[0].mxu0
        %v1225 = vadd.f32 0.0, %v1224
        %v1226 = vpop.f32.mrb[0].mxu0
        %1227 = vmatprep.mubr.bf16.mxu0 %v1108
        %1228 = vmatmul.mubr.bf16.gmra.mrb[0].mxu0 %v1107
        %v1229 = vpop.f32.mrb[0].mxu0
        %v1230 = vadd.f32 0.0, %v1229
        %v1231 = vpop.f32.mrb[0].mxu0
        %v1232 = vpop.f32.mrb[0].mxu0
        %v1233 = vadd.f32 0.0, %v1232
        %v1234 = vpop.f32.mrb[0].mxu0
        %1235 = vmatprep.mubr.bf16.mxu0 %v1110
        %1236 = vmatmul.mubr.bf16.gmra.mrb[0].mxu0 %v1109
        %v1237 = vpop.f32.mrb[0].mxu0
        %v1238 = vadd.f32 0.0, %v1237
        %v1239 = vpop.f32.mrb[0].mxu0
        %v1240 = vpop.f32.mrb[0].mxu0
        %v1241 = vadd.f32 0.0, %v1240
        %v1242 = vpop.f32.mrb[0].mxu0
        %1243 = vmatprep.mubr.bf16.mxu0 %v1112
        %1244 = vmatmul.mubr.bf16.gmra.mrb[0].mxu0 %v1111
        %v1245 = vpop.f32.mrb[0].mxu0
        %v1246 = vadd.f32 0.0, %v1245
        %v1247 = vpop.f32.mrb[0].mxu0
        %v1248 = vpop.f32.mrb[0].mxu0
        %v1249 = vadd.f32 0.0, %v1248
        %v1250 = vpop.f32.mrb[0].mxu0
        %1251 = vmatprep.mubr.bf16.mxu0 %v1114
        %1252 = vmatmul.mubr.bf16.gmra.mrb[0].mxu0 %v1113
        %v1253 = vpop.f32.mrb[0].mxu0
        %v1254 = vadd.f32 0.0, %v1253
        %v1255 = vpop.f32.mrb[0].mxu0
        %v1256 = vpop.f32.mrb[0].mxu0
        %v1257 = vadd.f32 0.0, %v1256
        %v1258 = vpop.f32.mrb[0].mxu0
        %1259 = vmatprep.mubr.bf16.mxu0 %v1116
        %1260 = vmatmul.mubr.bf16.gmra.mrb[0].mxu0 %v1115
        %v1261 = vpop.f32.mrb[0].mxu0
        %v1262 = vadd.f32 0.0, %v1261
        %v1263 = vpop.f32.mrb[0].mxu0
        %v1264 = vpop.f32.mrb[0].mxu0
        %v1265 = vadd.f32 0.0, %v1264
        %v1266 = vpop.f32.mrb[0].mxu0
        %1267 = vmatprep.mubr.bf16.mxu0 %v1118
        %1268 = vmatmul.mubr.bf16.gmra.mrb[0].mxu0 %v1117
        %v1269 = vpop.f32.mrb[0].mxu0
        %v1270 = vadd.f32 0.0, %v1269
        %v1271 = vpop.f32.mrb[0].mxu0
        %v1272 = vpop.f32.mrb[0].mxu0
        %v1273 = vadd.f32 0.0, %v1272
        %v1274 = vpop.f32.mrb[0].mxu0
        %1275 = vmatprep.mubr.bf16.mxu0 %v1120
        %1276 = vmatmul.mubr.bf16.gmra.mrb[0].mxu0 %v1119
        %v1277 = vpop.f32.mrb[0].mxu0
        %v1278 = vadd.f32 0.0, %v1277
        %v1279 = vpop.f32.mrb[0].mxu0
        %v1280 = vpop.f32.mrb[0].mxu0
        %v1281 = vadd.f32 0.0, %v1280
        %v1282 = vpop.f32.mrb[0].mxu0
        %1283 = vmatprep.mubr.bf16.mxu0 %v1122
        %1284 = vmatmul.mubr.bf16.gmra.mrb[0].mxu0 %v1121
        %v1285 = vpop.f32.mrb[0].mxu0
        %v1286 = vadd.f32 0.0, %v1285
        %v1287 = vpop.f32.mrb[0].mxu0
        %v1288 = vpop.f32.mrb[0].mxu0
        %v1289 = vadd.f32 0.0, %v1288
        %v1290 = vpop.f32.mrb[0].mxu0
        %1291 = vmatprep.mubr.bf16.mxu0 %v1124
        %1292 = vmatmul.mubr.bf16.gmra.mrb[0].mxu0 %v1123
        %v1293 = vpop.f32.mrb[0].mxu0
        %v1294 = vadd.f32 0.0, %v1293
        %v1295 = vpop.f32.mrb[0].mxu0
        %v1296 = vpop.f32.mrb[0].mxu0
        %v1297 = vadd.f32 0.0, %v1296
        %v1298 = vpop.f32.mrb[0].mxu0
        %1299 = vmatprep.mubr.bf16.mxu0 %v1126
        %1300 = vmatmul.mubr.bf16.gmra.mrb[0].mxu0 %v1125
        %v1301 = vpop.f32.mrb[0].mxu0
        %v1302 = vadd.f32 0.0, %v1301
        %v1303 = vpop.f32.mrb[0].mxu0
        %v1304 = vpop.f32.mrb[0].mxu0
        %v1305 = vadd.f32 0.0, %v1304
        %v1306 = vpop.f32.mrb[0].mxu0
        %1307 = vmatprep.mubr.bf16.mxu0 %v1128
        %1308 = vmatmul.mubr.bf16.gmra.mrb[0].mxu0 %v1127
        %v1309 = vpop.f32.mrb[0].mxu0
        %v1310 = vadd.f32 0.0, %v1309
        %v1311 = vpop.f32.mrb[0].mxu0
        %v1312 = vpop.f32.mrb[0].mxu0
        %v1313 = vadd.f32 0.0, %v1312
        %v1314 = vpop.f32.mrb[0].mxu0
        %1315 = vmatprep.mubr.bf16.mxu0 %v1130
        %1316 = vmatmul.mubr.bf16.gmra.mrb[0].mxu0 %v1129
        %v1317 = vpop.f32.mrb[0].mxu0
        %v1318 = vadd.f32 0.0, %v1317
        %v1319 = vpop.f32.mrb[0].mxu0
        %v1320 = vpop.f32.mrb[0].mxu0
        %v1321 = vadd.f32 0.0, %v1320
        %v1322 = vpop.f32.mrb[0].mxu0
        %1323 = vdwg.mxu0
        %v1324 = vadd.f32 %v939, %v1198
        %v1325 = vadd.f32 %v940, %v1201
        %v1326 = vadd.f32 %v941, %v1206
        %v1327 = vadd.f32 %v942, %v1209
        %v1328 = vadd.f32 %v943, %v1214
        %v1329 = vadd.f32 %v944, %v1217
        %v1330 = vadd.f32 %v945, %v1222
        %v1331 = vadd.f32 %v946, %v1225
        %v1332 = vadd.f32 %v947, %v1230
        %v1333 = vadd.f32 %v948, %v1233
        %v1334 = vadd.f32 %v949, %v1238
        %v1335 = vadd.f32 %v950, %v1241
        %v1336 = vadd.f32 %v951, %v1246
        %v1337 = vadd.f32 %v952, %v1249
        %v1338 = vadd.f32 %v953, %v1254
        %v1339 = vadd.f32 %v954, %v1257
        %v1340 = vadd.f32 %v955, %v1262
        %v1341 = vadd.f32 %v956, %v1265
        %v1342 = vadd.f32 %v957, %v1270
        %v1343 = vadd.f32 %v958, %v1273
        %v1344 = vadd.f32 %v959, %v1278
        %v1345 = vadd.f32 %v960, %v1281
        %v1346 = vadd.f32 %v961, %v1286
        %v1347 = vadd.f32 %v962, %v1289
        %v1348 = vadd.f32 %v963, %v1294
        %v1349 = vadd.f32 %v964, %v1297
        %v1350 = vadd.f32 %v965, %v1302
        %v1351 = vadd.f32 %v966, %v1305
        %v1352 = vadd.f32 %v967, %v1310
        %v1353 = vadd.f32 %v968, %v1313
        %v1354 = vadd.f32 %v969, %v1318
        %v1355 = vadd.f32 %v970, %v1321
        %1356 = vst [vmem:[#allocation2] sm:$0xff] %v1324
        %1357 = vst [vmem:[#allocation2 + $0x8] sm:$0xff] %v1325
        %1358 = vst [vmem:[#allocation2 + $0x10] sm:$0xff] %v1326
        %1359 = vst [vmem:[#allocation2 + $0x18] sm:$0xff] %v1327
        %1360 = vst [vmem:[#allocation2 + $0x20] sm:$0xff] %v1328
        %1361 = vst [vmem:[#allocation2 + $0x28] sm:$0xff] %v1329
        %1362 = vst [vmem:[#allocation2 + $0x30] sm:$0xff] %v1330
        %1363 = vst [vmem:[#allocation2 + $0x38] sm:$0xff] %v1331
        %1364 = vst [vmem:[#allocation2 + $0x40] sm:$0xff] %v1332
        %1365 = vst [vmem:[#allocation2 + $0x48] sm:$0xff] %v1333
        %1366 = vst [vmem:[#allocation2 + $0x50] sm:$0xff] %v1334
        %1367 = vst [vmem:[#allocation2 + $0x58] sm:$0xff] %v1335
        %1368 = vst [vmem:[#allocation2 + $0x60] sm:$0xff] %v1336
        %1369 = vst [vmem:[#allocation2 + $0x68] sm:$0xff] %v1337
        %1370 = vst [vmem:[#allocation2 + $0x70] sm:$0xff] %v1338
        %1371 = vst [vmem:[#allocation2 + $0x78] sm:$0xff] %v1339
        %1372 = vst [vmem:[#allocation2 + $0x80] sm:$0xff] %v1340
        %1373 = vst [vmem:[#allocation2 + $0x88] sm:$0xff] %v1341
        %1374 = vst [vmem:[#allocation2 + $0x90] sm:$0xff] %v1342
        %1375 = vst [vmem:[#allocation2 + $0x98] sm:$0xff] %v1343
        %1376 = vst [vmem:[#allocation2 + $0xa0] sm:$0xff] %v1344
        %1377 = vst [vmem:[#allocation2 + $0xa8] sm:$0xff] %v1345
        %1378 = vst [vmem:[#allocation2 + $0xb0] sm:$0xff] %v1346
        %1379 = vst [vmem:[#allocation2 + $0xb8] sm:$0xff] %v1347
        %1380 = vst [vmem:[#allocation2 + $0xc0] sm:$0xff] %v1348
        %1381 = vst [vmem:[#allocation2 + $0xc8] sm:$0xff] %v1349
        %1382 = vst [vmem:[#allocation2 + $0xd0] sm:$0xff] %v1350
        %1383 = vst [vmem:[#allocation2 + $0xd8] sm:$0xff] %v1351
        %1384 = vst [vmem:[#allocation2 + $0xe0] sm:$0xff] %v1352
        %1385 = vst [vmem:[#allocation2 + $0xe8] sm:$0xff] %v1353
        %1386 = vst [vmem:[#allocation2 + $0xf0] sm:$0xff] %v1354
        %1387 = vst [vmem:[#allocation2 + $0xf8] sm:$0xff] %v1355
        %p1388 = scmp.eq.s32.totalorder %s33, 1
        // Predicated region
        $region99: #{tpu_custom_call.1} parent=77 // pred_check
          %p1389 = pneg %p1388
        $region100: #{tpu_custom_call.1} parent=77 // pred_check_branch
          %1391 = sbr.rel (%p1389) target = $region102
        $region101: #{tpu_custom_call.1} parent=77 // pred_region
          %v1392 = vld [vmem:[#allocation2] sm:$0xff]
          %v1393 = vld [vmem:[#allocation2 + $0x8] sm:$0xff]
          %v1394 = vld [vmem:[#allocation2 + $0x10] sm:$0xff]
          %v1395 = vld [vmem:[#allocation2 + $0x18] sm:$0xff]
          %v1396 = vld [vmem:[#allocation2 + $0x20] sm:$0xff]
          %v1397 = vld [vmem:[#allocation2 + $0x28] sm:$0xff]
          %v1398 = vld [vmem:[#allocation2 + $0x30] sm:$0xff]
          %v1399 = vld [vmem:[#allocation2 + $0x38] sm:$0xff]
          %v1400 = vld [vmem:[#allocation2 + $0x40] sm:$0xff]
          %v1401 = vld [vmem:[#allocation2 + $0x48] sm:$0xff]
          %v1402 = vld [vmem:[#allocation2 + $0x50] sm:$0xff]
          %v1403 = vld [vmem:[#allocation2 + $0x58] sm:$0xff]
          %v1404 = vld [vmem:[#allocation2 + $0x60] sm:$0xff]
          %v1405 = vld [vmem:[#allocation2 + $0x68] sm:$0xff]
          %v1406 = vld [vmem:[#allocation2 + $0x70] sm:$0xff]
          %v1407 = vld [vmem:[#allocation2 + $0x78] sm:$0xff]
          %v1408 = vld [vmem:[#allocation2 + $0x80] sm:$0xff]
          %v1409 = vld [vmem:[#allocation2 + $0x88] sm:$0xff]
          %v1410 = vld [vmem:[#allocation2 + $0x90] sm:$0xff]
          %v1411 = vld [vmem:[#allocation2 + $0x98] sm:$0xff]
          %v1412 = vld [vmem:[#allocation2 + $0xa0] sm:$0xff]
          %v1413 = vld [vmem:[#allocation2 + $0xa8] sm:$0xff]
          %v1414 = vld [vmem:[#allocation2 + $0xb0] sm:$0xff]
          %v1415 = vld [vmem:[#allocation2 + $0xb8] sm:$0xff]
          %v1416 = vld [vmem:[#allocation2 + $0xc0] sm:$0xff]
          %v1417 = vld [vmem:[#allocation2 + $0xc8] sm:$0xff]
          %v1418 = vld [vmem:[#allocation2 + $0xd0] sm:$0xff]
          %v1419 = vld [vmem:[#allocation2 + $0xd8] sm:$0xff]
          %v1420 = vld [vmem:[#allocation2 + $0xe0] sm:$0xff]
          %v1421 = vld [vmem:[#allocation2 + $0xe8] sm:$0xff]
          %v1422 = vld [vmem:[#allocation2 + $0xf0] sm:$0xff]
          %v1423 = vld [vmem:[#allocation2 + $0xf8] sm:$0xff]
          %v1424 = vld [vmem:[%s590] sm:$0xff]
          %v1425 = vld [vmem:[%s590 + $0x8] sm:$0xff]
          %v1426 = vld [vmem:[%s590 + $0x10] sm:$0xff]
          %v1427 = vld [vmem:[%s590 + $0x18] sm:$0xff]
          %v1428 = vld [vmem:[%s590 + $0x20] sm:$0xff]
          %v1429 = vld [vmem:[%s590 + $0x28] sm:$0xff]
          %v1430 = vld [vmem:[%s590 + $0x30] sm:$0xff]
          %v1431 = vld [vmem:[%s590 + $0x38] sm:$0xff]
          %v1432 = vld [vmem:[%s590 + $0x40] sm:$0xff]
          %v1433 = vld [vmem:[%s590 + $0x48] sm:$0xff]
          %v1434 = vld [vmem:[%s590 + $0x50] sm:$0xff]
          %v1435 = vld [vmem:[%s590 + $0x58] sm:$0xff]
          %v1436 = vld [vmem:[%s590 + $0x60] sm:$0xff]
          %v1437 = vld [vmem:[%s590 + $0x68] sm:$0xff]
          %v1438 = vld [vmem:[%s590 + $0x70] sm:$0xff]
          %v1439 = vld [vmem:[%s590 + $0x78] sm:$0xff]
          %v1440 = vld [vmem:[%s590 + $0x80] sm:$0xff]
          %v1441 = vld [vmem:[%s590 + $0x88] sm:$0xff]
          %v1442 = vld [vmem:[%s590 + $0x90] sm:$0xff]
          %v1443 = vld [vmem:[%s590 + $0x98] sm:$0xff]
          %v1444 = vld [vmem:[%s590 + $0xa0] sm:$0xff]
          %v1445 = vld [vmem:[%s590 + $0xa8] sm:$0xff]
          %v1446 = vld [vmem:[%s590 + $0xb0] sm:$0xff]
          %v1447 = vld [vmem:[%s590 + $0xb8] sm:$0xff]
          %v1448 = vld [vmem:[%s590 + $0xc0] sm:$0xff]
          %v1449 = vld [vmem:[%s590 + $0xc8] sm:$0xff]
          %v1450 = vld [vmem:[%s590 + $0xd0] sm:$0xff]
          %v1451 = vld [vmem:[%s590 + $0xd8] sm:$0xff]
          %v1452 = vld [vmem:[%s590 + $0xe0] sm:$0xff]
          %v1453 = vld [vmem:[%s590 + $0xe8] sm:$0xff]
          %v1454 = vld [vmem:[%s590 + $0xf0] sm:$0xff]
          %v1455 = vld [vmem:[%s590 + $0xf8] sm:$0xff]
          %1457 = vset.pattern.permute.xlu0 0
          %1458 = vperm.xlu0 %1457, %v1424
          %v1459 = vpop.permute.xlu0 %1458
          %1462 = vset.pattern.permute.xlu0 0
          %1463 = vperm.xlu0 %1462, %v1425
          %v1464 = vpop.permute.xlu0 %1463
          %1467 = vset.pattern.permute.xlu0 0
          %1468 = vperm.xlu0 %1467, %v1426
          %v1469 = vpop.permute.xlu0 %1468
          %1472 = vset.pattern.permute.xlu0 0
          %1473 = vperm.xlu0 %1472, %v1427
          %v1474 = vpop.permute.xlu0 %1473
          %1477 = vset.pattern.permute.xlu0 0
          %1478 = vperm.xlu0 %1477, %v1428
          %v1479 = vpop.permute.xlu0 %1478
          %1482 = vset.pattern.permute.xlu0 0
          %1483 = vperm.xlu0 %1482, %v1429
          %v1484 = vpop.permute.xlu0 %1483
          %1487 = vset.pattern.permute.xlu0 0
          %1488 = vperm.xlu0 %1487, %v1430
          %v1489 = vpop.permute.xlu0 %1488
          %1492 = vset.pattern.permute.xlu0 0
          %1493 = vperm.xlu0 %1492, %v1431
          %v1494 = vpop.permute.xlu0 %1493
          %1497 = vset.pattern.permute.xlu0 0
          %1498 = vperm.xlu0 %1497, %v1432
          %v1499 = vpop.permute.xlu0 %1498
          %1502 = vset.pattern.permute.xlu0 0
          %1503 = vperm.xlu0 %1502, %v1433
          %v1504 = vpop.permute.xlu0 %1503
          %1507 = vset.pattern.permute.xlu0 0
          %1508 = vperm.xlu0 %1507, %v1434
          %v1509 = vpop.permute.xlu0 %1508
          %1512 = vset.pattern.permute.xlu0 0
          %1513 = vperm.xlu0 %1512, %v1435
          %v1514 = vpop.permute.xlu0 %1513
          %1517 = vset.pattern.permute.xlu0 0
          %1518 = vperm.xlu0 %1517, %v1436
          %v1519 = vpop.permute.xlu0 %1518
          %1522 = vset.pattern.permute.xlu0 0
          %1523 = vperm.xlu0 %1522, %v1437
          %v1524 = vpop.permute.xlu0 %1523
          %1527 = vset.pattern.permute.xlu0 0
          %1528 = vperm.xlu0 %1527, %v1438
          %v1529 = vpop.permute.xlu0 %1528
          %1532 = vset.pattern.permute.xlu0 0
          %1533 = vperm.xlu0 %1532, %v1439
          %v1534 = vpop.permute.xlu0 %1533
          %1537 = vset.pattern.permute.xlu0 0
          %1538 = vperm.xlu0 %1537, %v1440
          %v1539 = vpop.permute.xlu0 %1538
          %1542 = vset.pattern.permute.xlu0 0
          %1543 = vperm.xlu0 %1542, %v1441
          %v1544 = vpop.permute.xlu0 %1543
          %1547 = vset.pattern.permute.xlu0 0
          %1548 = vperm.xlu0 %1547, %v1442
          %v1549 = vpop.permute.xlu0 %1548
          %1552 = vset.pattern.permute.xlu0 0
          %1553 = vperm.xlu0 %1552, %v1443
          %v1554 = vpop.permute.xlu0 %1553
          %1557 = vset.pattern.permute.xlu0 0
          %1558 = vperm.xlu0 %1557, %v1444
          %v1559 = vpop.permute.xlu0 %1558
          %1562 = vset.pattern.permute.xlu0 0
          %1563 = vperm.xlu0 %1562, %v1445
          %v1564 = vpop.permute.xlu0 %1563
          %1567 = vset.pattern.permute.xlu0 0
          %1568 = vperm.xlu0 %1567, %v1446
          %v1569 = vpop.permute.xlu0 %1568
          %1572 = vset.pattern.permute.xlu0 0
          %1573 = vperm.xlu0 %1572, %v1447
          %v1574 = vpop.permute.xlu0 %1573
          %1577 = vset.pattern.permute.xlu0 0
          %1578 = vperm.xlu0 %1577, %v1448
          %v1579 = vpop.permute.xlu0 %1578
          %1582 = vset.pattern.permute.xlu0 0
          %1583 = vperm.xlu0 %1582, %v1449
          %v1584 = vpop.permute.xlu0 %1583
          %1587 = vset.pattern.permute.xlu0 0
          %1588 = vperm.xlu0 %1587, %v1450
          %v1589 = vpop.permute.xlu0 %1588
          %1592 = vset.pattern.permute.xlu0 0
          %1593 = vperm.xlu0 %1592, %v1451
          %v1594 = vpop.permute.xlu0 %1593
          %1597 = vset.pattern.permute.xlu0 0
          %1598 = vperm.xlu0 %1597, %v1452
          %v1599 = vpop.permute.xlu0 %1598
          %1602 = vset.pattern.permute.xlu0 0
          %1603 = vperm.xlu0 %1602, %v1453
          %v1604 = vpop.permute.xlu0 %1603
          %1607 = vset.pattern.permute.xlu0 0
          %1608 = vperm.xlu0 %1607, %v1454
          %v1609 = vpop.permute.xlu0 %1608
          %1612 = vset.pattern.permute.xlu0 0
          %1613 = vperm.xlu0 %1612, %v1455
          %v1614 = vpop.permute.xlu0 %1613
          %v1616 = vmul.f32 %v1392, %v1459
          %v1617 = vmul.f32 %v1393, %v1464
          %v1618 = vmul.f32 %v1394, %v1469
          %v1619 = vmul.f32 %v1395, %v1474
          %v1620 = vmul.f32 %v1396, %v1479
          %v1621 = vmul.f32 %v1397, %v1484
          %v1622 = vmul.f32 %v1398, %v1489
          %v1623 = vmul.f32 %v1399, %v1494
          %v1624 = vmul.f32 %v1400, %v1499
          %v1625 = vmul.f32 %v1401, %v1504
          %v1626 = vmul.f32 %v1402, %v1509
          %v1627 = vmul.f32 %v1403, %v1514
          %v1628 = vmul.f32 %v1404, %v1519
          %v1629 = vmul.f32 %v1405, %v1524
          %v1630 = vmul.f32 %v1406, %v1529
          %v1631 = vmul.f32 %v1407, %v1534
          %v1632 = vmul.f32 %v1408, %v1539
          %v1633 = vmul.f32 %v1409, %v1544
          %v1634 = vmul.f32 %v1410, %v1549
          %v1635 = vmul.f32 %v1411, %v1554
          %v1636 = vmul.f32 %v1412, %v1559
          %v1637 = vmul.f32 %v1413, %v1564
          %v1638 = vmul.f32 %v1414, %v1569
          %v1639 = vmul.f32 %v1415, %v1574
          %v1640 = vmul.f32 %v1416, %v1579
          %v1641 = vmul.f32 %v1417, %v1584
          %v1642 = vmul.f32 %v1418, %v1589
          %v1643 = vmul.f32 %v1419, %v1594
          %v1644 = vmul.f32 %v1420, %v1599
          %v1645 = vmul.f32 %v1421, %v1604
          %v1646 = vmul.f32 %v1422, %v1609
          %v1647 = vmul.f32 %v1423, %v1614
          %v1648 = vpack.c.bf16 %v1617, %v1616
          %v1649 = vpack.c.bf16 %v1619, %v1618
          %v1650 = vpack.c.bf16 %v1621, %v1620
          %v1651 = vpack.c.bf16 %v1623, %v1622
          %v1652 = vpack.c.bf16 %v1625, %v1624
          %v1653 = vpack.c.bf16 %v1627, %v1626
          %v1654 = vpack.c.bf16 %v1629, %v1628
          %v1655 = vpack.c.bf16 %v1631, %v1630
          %v1656 = vpack.c.bf16 %v1633, %v1632
          %v1657 = vpack.c.bf16 %v1635, %v1634
          %v1658 = vpack.c.bf16 %v1637, %v1636
          %v1659 = vpack.c.bf16 %v1639, %v1638
          %v1660 = vpack.c.bf16 %v1641, %v1640
          %v1661 = vpack.c.bf16 %v1643, %v1642
          %v1662 = vpack.c.bf16 %v1645, %v1644
          %v1663 = vpack.c.bf16 %v1647, %v1646
          %v1664 = vld [vmem:[%s568] sm:$0xff]
          %v1665 = vld [vmem:[%s568 + $0x8] sm:$0xff]
          %v1666 = vld [vmem:[%s568 + $0x10] sm:$0xff]
          %v1667 = vld [vmem:[%s568 + $0x18] sm:$0xff]
          %v1668 = vld [vmem:[%s568 + $0x20] sm:$0xff]
          %v1669 = vld [vmem:[%s568 + $0x28] sm:$0xff]
          %v1670 = vld [vmem:[%s568 + $0x30] sm:$0xff]
          %v1671 = vld [vmem:[%s568 + $0x38] sm:$0xff]
          %v1672 = vld [vmem:[%s568 + $0x40] sm:$0xff]
          %v1673 = vld [vmem:[%s568 + $0x48] sm:$0xff]
          %v1674 = vld [vmem:[%s568 + $0x50] sm:$0xff]
          %v1675 = vld [vmem:[%s568 + $0x58] sm:$0xff]
          %v1676 = vld [vmem:[%s568 + $0x60] sm:$0xff]
          %v1677 = vld [vmem:[%s568 + $0x68] sm:$0xff]
          %v1678 = vld [vmem:[%s568 + $0x70] sm:$0xff]
          %v1679 = vld [vmem:[%s568 + $0x78] sm:$0xff]
          %v1680 = vld [vmem:[%s568 + $0x80] sm:$0xff]
          %v1681 = vld [vmem:[%s568 + $0x88] sm:$0xff]
          %v1682 = vld [vmem:[%s568 + $0x90] sm:$0xff]
          %v1683 = vld [vmem:[%s568 + $0x98] sm:$0xff]
          %v1684 = vld [vmem:[%s568 + $0xa0] sm:$0xff]
          %v1685 = vld [vmem:[%s568 + $0xa8] sm:$0xff]
          %v1686 = vld [vmem:[%s568 + $0xb0] sm:$0xff]
          %v1687 = vld [vmem:[%s568 + $0xb8] sm:$0xff]
          %v1688 = vld [vmem:[%s568 + $0xc0] sm:$0xff]
          %v1689 = vld [vmem:[%s568 + $0xc8] sm:$0xff]
          %v1690 = vld [vmem:[%s568 + $0xd0] sm:$0xff]
          %v1691 = vld [vmem:[%s568 + $0xd8] sm:$0xff]
          %v1692 = vld [vmem:[%s568 + $0xe0] sm:$0xff]
          %v1693 = vld [vmem:[%s568 + $0xe8] sm:$0xff]
          %v1694 = vld [vmem:[%s568 + $0xf0] sm:$0xff]
          %v1695 = vld [vmem:[%s568 + $0xf8] sm:$0xff]
          %v1696 = vld [vmem:[%s513] sm:$0xf]
          %v1697 = vld [vmem:[%s513 + $0x4] sm:$0xf]
          %v1698 = vld [vmem:[%s513 + $0x8] sm:$0xf]
          %v1699 = vld [vmem:[%s513 + $0xc] sm:$0xf]
          %v1700 = vld [vmem:[%s513 + $0x10] sm:$0xf]
          %v1701 = vld [vmem:[%s513 + $0x14] sm:$0xf]
          %v1702 = vld [vmem:[%s513 + $0x18] sm:$0xf]
          %v1703 = vld [vmem:[%s513 + $0x1c] sm:$0xf]
          %v1704 = vld [vmem:[%s513 + $0x20] sm:$0xf]
          %v1705 = vld [vmem:[%s513 + $0x24] sm:$0xf]
          %v1706 = vld [vmem:[%s513 + $0x28] sm:$0xf]
          %v1707 = vld [vmem:[%s513 + $0x2c] sm:$0xf]
          %v1708 = vld [vmem:[%s513 + $0x30] sm:$0xf]
          %v1709 = vld [vmem:[%s513 + $0x34] sm:$0xf]
          %v1710 = vld [vmem:[%s513 + $0x38] sm:$0xf]
          %v1711 = vld [vmem:[%s513 + $0x3c] sm:$0xf]
          %v1728 = vunpack.c.l.b16 %v1696
          %v1729 = vunpack.c.l.b16 %v1697
          %v1730 = vunpack.c.l.b16 %v1698
          %v1731 = vunpack.c.l.b16 %v1699
          %v1732 = vunpack.c.l.b16 %v1700
          %v1733 = vunpack.c.l.b16 %v1701
          %v1734 = vunpack.c.l.b16 %v1702
          %v1735 = vunpack.c.l.b16 %v1703
          %v1736 = vunpack.c.l.b16 %v1704
          %v1737 = vunpack.c.l.b16 %v1705
          %v1738 = vunpack.c.l.b16 %v1706
          %v1739 = vunpack.c.l.b16 %v1707
          %v1740 = vunpack.c.l.b16 %v1708
          %v1741 = vunpack.c.l.b16 %v1709
          %v1742 = vunpack.c.l.b16 %v1710
          %v1743 = vunpack.c.l.b16 %v1711
          %v1744 = vpack.c.b16 %v1729, %v1728
          %v1745 = vpack.c.b16 %v1731, %v1730
          %v1746 = vpack.c.b16 %v1733, %v1732
          %v1747 = vpack.c.b16 %v1735, %v1734
          %v1748 = vpack.c.b16 %v1737, %v1736
          %v1749 = vpack.c.b16 %v1739, %v1738
          %v1750 = vpack.c.b16 %v1741, %v1740
          %v1751 = vpack.c.b16 %v1743, %v1742
          %1760 = vmatprep.subr.bf16.mxu0 0
          %1761 = vmatpush1.bf16.msra.mxu0 %v1744
          %1762 = vmatprep.subr.bf16.mxu0 0
          %1763 = vmatpush1.bf16.msra.mxu0 %v1745
          %1764 = vmatprep.subr.bf16.mxu0 0
          %1765 = vmatpush1.bf16.msra.mxu0 %v1746
          %1766 = vmatprep.subr.bf16.mxu0 0
          %1767 = vmatpush1.bf16.msra.mxu0 %v1747
          %1768 = vmatprep.subr.bf16.mxu0 0
          %1769 = vmatpush1.bf16.msra.mxu0 %v1748
          %1770 = vmatprep.subr.bf16.mxu0 0
          %1771 = vmatpush1.bf16.msra.mxu0 %v1749
          %1772 = vmatprep.subr.bf16.mxu0 0
          %1773 = vmatpush1.bf16.msra.mxu0 %v1750
          %1774 = vmatprep.subr.bf16.mxu0 0
          %1775 = vmatpush1.bf16.msra.mxu0 %v1751
          %1776 = vmatprep.subr.bf16.mxu0 0
          %1777 = vmatpush1.bf16.msra.mxu0 0
          %1778 = vmatprep.subr.bf16.mxu0 0
          %1779 = vmatpush1.bf16.msra.mxu0 0
          %1780 = vmatprep.subr.bf16.mxu0 0
          %1781 = vmatpush1.bf16.msra.mxu0 0
          %1782 = vmatprep.subr.bf16.mxu0 0
          %1783 = vmatpush1.bf16.msra.mxu0 0
          %1784 = vmatprep.subr.bf16.mxu0 0
          %1785 = vmatpush1.bf16.msra.mxu0 0
          %1786 = vmatprep.subr.bf16.mxu0 0
          %1787 = vmatpush1.bf16.msra.mxu0 0
          %1788 = vmatprep.subr.bf16.mxu0 0
          %1789 = vmatpush1.bf16.msra.mxu0 0
          %1790 = vmatprep.subr.bf16.mxu0 0
          %1791 = vmatpush1.bf16.msra.mxu0 0
          %1792 = vmatprep.mubr.bf16.mxu0 0
          %1793 = vmatmul.mubr.bf16.gmra.mrb[0].mxu0 %v1648
          %v1794 = vpop.f32.mrb[0].mxu0
          %v1795 = vadd.f32 0.0, %v1794
          %v1796 = vpop.f32.mrb[0].mxu0
          %v1797 = vpop.f32.mrb[0].mxu0
          %v1798 = vadd.f32 0.0, %v1797
          %v1799 = vpop.f32.mrb[0].mxu0
          %1800 = vmatprep.mubr.bf16.mxu0 0
          %1801 = vmatmul.mubr.bf16.gmra.mrb[0].mxu0 %v1649
          %v1802 = vpop.f32.mrb[0].mxu0
          %v1803 = vadd.f32 0.0, %v1802
          %v1804 = vpop.f32.mrb[0].mxu0
          %v1805 = vpop.f32.mrb[0].mxu0
          %v1806 = vadd.f32 0.0, %v1805
          %v1807 = vpop.f32.mrb[0].mxu0
          %1808 = vmatprep.mubr.bf16.mxu0 0
          %1809 = vmatmul.mubr.bf16.gmra.mrb[0].mxu0 %v1650
          %v1810 = vpop.f32.mrb[0].mxu0
          %v1811 = vadd.f32 0.0, %v1810
          %v1812 = vpop.f32.mrb[0].mxu0
          %v1813 = vpop.f32.mrb[0].mxu0
          %v1814 = vadd.f32 0.0, %v1813
          %v1815 = vpop.f32.mrb[0].mxu0
          %1816 = vmatprep.mubr.bf16.mxu0 0
          %1817 = vmatmul.mubr.bf16.gmra.mrb[0].mxu0 %v1651
          %v1818 = vpop.f32.mrb[0].mxu0
          %v1819 = vadd.f32 0.0, %v1818
          %v1820 = vpop.f32.mrb[0].mxu0
          %v1821 = vpop.f32.mrb[0].mxu0
          %v1822 = vadd.f32 0.0, %v1821
          %v1823 = vpop.f32.mrb[0].mxu0
          %1824 = vmatprep.mubr.bf16.mxu0 0
          %1825 = vmatmul.mubr.bf16.gmra.mrb[0].mxu0 %v1652
          %v1826 = vpop.f32.mrb[0].mxu0
          %v1827 = vadd.f32 0.0, %v1826
          %v1828 = vpop.f32.mrb[0].mxu0
          %v1829 = vpop.f32.mrb[0].mxu0
          %v1830 = vadd.f32 0.0, %v1829
          %v1831 = vpop.f32.mrb[0].mxu0
          %1832 = vmatprep.mubr.bf16.mxu0 0
          %1833 = vmatmul.mubr.bf16.gmra.mrb[0].mxu0 %v1653
          %v1834 = vpop.f32.mrb[0].mxu0
          %v1835 = vadd.f32 0.0, %v1834
          %v1836 = vpop.f32.mrb[0].mxu0
          %v1837 = vpop.f32.mrb[0].mxu0
          %v1838 = vadd.f32 0.0, %v1837
          %v1839 = vpop.f32.mrb[0].mxu0
          %1840 = vmatprep.mubr.bf16.mxu0 0
          %1841 = vmatmul.mubr.bf16.gmra.mrb[0].mxu0 %v1654
          %v1842 = vpop.f32.mrb[0].mxu0
          %v1843 = vadd.f32 0.0, %v1842
          %v1844 = vpop.f32.mrb[0].mxu0
          %v1845 = vpop.f32.mrb[0].mxu0
          %v1846 = vadd.f32 0.0, %v1845
          %v1847 = vpop.f32.mrb[0].mxu0
          %1848 = vmatprep.mubr.bf16.mxu0 0
          %1849 = vmatmul.mubr.bf16.gmra.mrb[0].mxu0 %v1655
          %v1850 = vpop.f32.mrb[0].mxu0
          %v1851 = vadd.f32 0.0, %v1850
          %v1852 = vpop.f32.mrb[0].mxu0
          %v1853 = vpop.f32.mrb[0].mxu0
          %v1854 = vadd.f32 0.0, %v1853
          %v1855 = vpop.f32.mrb[0].mxu0
          %1856 = vmatprep.mubr.bf16.mxu0 0
          %1857 = vmatmul.mubr.bf16.gmra.mrb[0].mxu0 %v1656
          %v1858 = vpop.f32.mrb[0].mxu0
          %v1859 = vadd.f32 0.0, %v1858
          %v1860 = vpop.f32.mrb[0].mxu0
          %v1861 = vpop.f32.mrb[0].mxu0
          %v1862 = vadd.f32 0.0, %v1861
          %v1863 = vpop.f32.mrb[0].mxu0
          %1864 = vmatprep.mubr.bf16.mxu0 0
          %1865 = vmatmul.mubr.bf16.gmra.mrb[0].mxu0 %v1657
          %v1866 = vpop.f32.mrb[0].mxu0
          %v1867 = vadd.f32 0.0, %v1866
          %v1868 = vpop.f32.mrb[0].mxu0
          %v1869 = vpop.f32.mrb[0].mxu0
          %v1870 = vadd.f32 0.0, %v1869
          %v1871 = vpop.f32.mrb[0].mxu0
          %1872 = vmatprep.mubr.bf16.mxu0 0
          %1873 = vmatmul.mubr.bf16.gmra.mrb[0].mxu0 %v1658
          %v1874 = vpop.f32.mrb[0].mxu0
          %v1875 = vadd.f32 0.0, %v1874
          %v1876 = vpop.f32.mrb[0].mxu0
          %v1877 = vpop.f32.mrb[0].mxu0
          %v1878 = vadd.f32 0.0, %v1877
          %v1879 = vpop.f32.mrb[0].mxu0
          %1880 = vmatprep.mubr.bf16.mxu0 0
          %1881 = vmatmul.mubr.bf16.gmra.mrb[0].mxu0 %v1659
          %v1882 = vpop.f32.mrb[0].mxu0
          %v1883 = vadd.f32 0.0, %v1882
          %v1884 = vpop.f32.mrb[0].mxu0
          %v1885 = vpop.f32.mrb[0].mxu0
          %v1886 = vadd.f32 0.0, %v1885
          %v1887 = vpop.f32.mrb[0].mxu0
          %1888 = vmatprep.mubr.bf16.mxu0 0
          %1889 = vmatmul.mubr.bf16.gmra.mrb[0].mxu0 %v1660
          %v1890 = vpop.f32.mrb[0].mxu0
          %v1891 = vadd.f32 0.0, %v1890
          %v1892 = vpop.f32.mrb[0].mxu0
          %v1893 = vpop.f32.mrb[0].mxu0
          %v1894 = vadd.f32 0.0, %v1893
          %v1895 = vpop.f32.mrb[0].mxu0
          %1896 = vmatprep.mubr.bf16.mxu0 0
          %1897 = vmatmul.mubr.bf16.gmra.mrb[0].mxu0 %v1661
          %v1898 = vpop.f32.mrb[0].mxu0
          %v1899 = vadd.f32 0.0, %v1898
          %v1900 = vpop.f32.mrb[0].mxu0
          %v1901 = vpop.f32.mrb[0].mxu0
          %v1902 = vadd.f32 0.0, %v1901
          %v1903 = vpop.f32.mrb[0].mxu0
          %1904 = vmatprep.mubr.bf16.mxu0 0
          %1905 = vmatmul.mubr.bf16.gmra.mrb[0].mxu0 %v1662
          %v1906 = vpop.f32.mrb[0].mxu0
          %v1907 = vadd.f32 0.0, %v1906
          %v1908 = vpop.f32.mrb[0].mxu0
          %v1909 = vpop.f32.mrb[0].mxu0
          %v1910 = vadd.f32 0.0, %v1909
          %v1911 = vpop.f32.mrb[0].mxu0
          %1912 = vmatprep.mubr.bf16.mxu0 0
          %1913 = vmatmul.mubr.bf16.gmra.mrb[0].mxu0 %v1663
          %v1914 = vpop.f32.mrb[0].mxu0
          %v1915 = vadd.f32 0.0, %v1914
          %v1916 = vpop.f32.mrb[0].mxu0
          %v1917 = vpop.f32.mrb[0].mxu0
          %v1918 = vadd.f32 0.0, %v1917
          %v1919 = vpop.f32.mrb[0].mxu0
          %1920 = vdwg.mxu0
          %v1921 = vadd.f32 %v1664, %v1795
          %v1922 = vadd.f32 %v1665, %v1798
          %v1923 = vadd.f32 %v1666, %v1803
          %v1924 = vadd.f32 %v1667, %v1806
          %v1925 = vadd.f32 %v1668, %v1811
          %v1926 = vadd.f32 %v1669, %v1814
          %v1927 = vadd.f32 %v1670, %v1819
          %v1928 = vadd.f32 %v1671, %v1822
          %v1929 = vadd.f32 %v1672, %v1827
          %v1930 = vadd.f32 %v1673, %v1830
          %v1931 = vadd.f32 %v1674, %v1835
          %v1932 = vadd.f32 %v1675, %v1838
          %v1933 = vadd.f32 %v1676, %v1843
          %v1934 = vadd.f32 %v1677, %v1846
          %v1935 = vadd.f32 %v1678, %v1851
          %v1936 = vadd.f32 %v1679, %v1854
          %v1937 = vadd.f32 %v1680, %v1859
          %v1938 = vadd.f32 %v1681, %v1862
          %v1939 = vadd.f32 %v1682, %v1867
          %v1940 = vadd.f32 %v1683, %v1870
          %v1941 = vadd.f32 %v1684, %v1875
          %v1942 = vadd.f32 %v1685, %v1878
          %v1943 = vadd.f32 %v1686, %v1883
          %v1944 = vadd.f32 %v1687, %v1886
          %v1945 = vadd.f32 %v1688, %v1891
          %v1946 = vadd.f32 %v1689, %v1894
          %v1947 = vadd.f32 %v1690, %v1899
          %v1948 = vadd.f32 %v1691, %v1902
          %v1949 = vadd.f32 %v1692, %v1907
          %v1950 = vadd.f32 %v1693, %v1910
          %v1951 = vadd.f32 %v1694, %v1915
          %v1952 = vadd.f32 %v1695, %v1918
          %1953 = vst [vmem:[%s568] sm:$0xff] %v1921
          %1954 = vst [vmem:[%s568 + $0x8] sm:$0xff] %v1922
          %1955 = vst [vmem:[%s568 + $0x10] sm:$0xff] %v1923
          %1956 = vst [vmem:[%s568 + $0x18] sm:$0xff] %v1924
          %1957 = vst [vmem:[%s568 + $0x20] sm:$0xff] %v1925
          %1958 = vst [vmem:[%s568 + $0x28] sm:$0xff] %v1926
          %1959 = vst [vmem:[%s568 + $0x30] sm:$0xff] %v1927
          %1960 = vst [vmem:[%s568 + $0x38] sm:$0xff] %v1928
          %1961 = vst [vmem:[%s568 + $0x40] sm:$0xff] %v1929
          %1962 = vst [vmem:[%s568 + $0x48] sm:$0xff] %v1930
          %1963 = vst [vmem:[%s568 + $0x50] sm:$0xff] %v1931
          %1964 = vst [vmem:[%s568 + $0x58] sm:$0xff] %v1932
          %1965 = vst [vmem:[%s568 + $0x60] sm:$0xff] %v1933
          %1966 = vst [vmem:[%s568 + $0x68] sm:$0xff] %v1934
          %1967 = vst [vmem:[%s568 + $0x70] sm:$0xff] %v1935
          %1968 = vst [vmem:[%s568 + $0x78] sm:$0xff] %v1936
          %1969 = vst [vmem:[%s568 + $0x80] sm:$0xff] %v1937
          %1970 = vst [vmem:[%s568 + $0x88] sm:$0xff] %v1938
          %1971 = vst [vmem:[%s568 + $0x90] sm:$0xff] %v1939
          %1972 = vst [vmem:[%s568 + $0x98] sm:$0xff] %v1940
          %1973 = vst [vmem:[%s568 + $0xa0] sm:$0xff] %v1941
          %1974 = vst [vmem:[%s568 + $0xa8] sm:$0xff] %v1942
          %1975 = vst [vmem:[%s568 + $0xb0] sm:$0xff] %v1943
          %1976 = vst [vmem:[%s568 + $0xb8] sm:$0xff] %v1944
          %1977 = vst [vmem:[%s568 + $0xc0] sm:$0xff] %v1945
          %1978 = vst [vmem:[%s568 + $0xc8] sm:$0xff] %v1946
          %1979 = vst [vmem:[%s568 + $0xd0] sm:$0xff] %v1947
          %1980 = vst [vmem:[%s568 + $0xd8] sm:$0xff] %v1948
          %1981 = vst [vmem:[%s568 + $0xe0] sm:$0xff] %v1949
          %1982 = vst [vmem:[%s568 + $0xe8] sm:$0xff] %v1950
          %1983 = vst [vmem:[%s568 + $0xf0] sm:$0xff] %v1951
          %1984 = vst [vmem:[%s568 + $0xf8] sm:$0xff] %v1952
          %p1985 = scmp.eq.s32.totalorder %s32, 2
          // Predicated region
          $region103: #{tpu_custom_call.1} parent=101 // pred_check
            %p1986 = pneg %p1985
          $region104: #{tpu_custom_call.1} parent=101 // pred_check_branch
            %1988 = sbr.rel (%p1986) target = $region106
          $region105: #{tpu_custom_call.1} parent=101 // pred_region
            %v1989 = vld [vmem:[%s568] sm:$0xff]
            %v1990 = vld [vmem:[%s568 + $0x8] sm:$0xff]
            %v1991 = vld [vmem:[%s568 + $0x10] sm:$0xff]
            %v1992 = vld [vmem:[%s568 + $0x18] sm:$0xff]
            %v1993 = vld [vmem:[%s568 + $0x20] sm:$0xff]
            %v1994 = vld [vmem:[%s568 + $0x28] sm:$0xff]
            %v1995 = vld [vmem:[%s568 + $0x30] sm:$0xff]
            %v1996 = vld [vmem:[%s568 + $0x38] sm:$0xff]
            %v1997 = vld [vmem:[%s568 + $0x40] sm:$0xff]
            %v1998 = vld [vmem:[%s568 + $0x48] sm:$0xff]
            %v1999 = vld [vmem:[%s568 + $0x50] sm:$0xff]
            %v2000 = vld [vmem:[%s568 + $0x58] sm:$0xff]
            %v2001 = vld [vmem:[%s568 + $0x60] sm:$0xff]
            %v2002 = vld [vmem:[%s568 + $0x68] sm:$0xff]
            %v2003 = vld [vmem:[%s568 + $0x70] sm:$0xff]
            %v2004 = vld [vmem:[%s568 + $0x78] sm:$0xff]
            %v2005 = vld [vmem:[%s568 + $0x80] sm:$0xff]
            %v2006 = vld [vmem:[%s568 + $0x88] sm:$0xff]
            %v2007 = vld [vmem:[%s568 + $0x90] sm:$0xff]
            %v2008 = vld [vmem:[%s568 + $0x98] sm:$0xff]
            %v2009 = vld [vmem:[%s568 + $0xa0] sm:$0xff]
            %v2010 = vld [vmem:[%s568 + $0xa8] sm:$0xff]
            %v2011 = vld [vmem:[%s568 + $0xb0] sm:$0xff]
            %v2012 = vld [vmem:[%s568 + $0xb8] sm:$0xff]
            %v2013 = vld [vmem:[%s568 + $0xc0] sm:$0xff]
            %v2014 = vld [vmem:[%s568 + $0xc8] sm:$0xff]
            %v2015 = vld [vmem:[%s568 + $0xd0] sm:$0xff]
            %v2016 = vld [vmem:[%s568 + $0xd8] sm:$0xff]
            %v2017 = vld [vmem:[%s568 + $0xe0] sm:$0xff]
            %v2018 = vld [vmem:[%s568 + $0xe8] sm:$0xff]
            %v2019 = vld [vmem:[%s568 + $0xf0] sm:$0xff]
            %v2020 = vld [vmem:[%s568 + $0xf8] sm:$0xff]
            %v2021 = vld [vmem:[%s5] sm:$0x1]
            %v2023 = vlaneseq
            %v2024 = vshrl.u32 %v2023, 7
            %v2025 = vsub.s32 0, %v2024
            %v2026 = vrot.slane %v2021, %v2025
            %v2028 = vadd.f32 %v1989, %v2026
            %v2029 = vadd.f32 %v1990, %v2026
            %v2030 = vadd.f32 %v1991, %v2026
            %v2031 = vadd.f32 %v1992, %v2026
            %v2032 = vadd.f32 %v1993, %v2026
            %v2033 = vadd.f32 %v1994, %v2026
            %v2034 = vadd.f32 %v1995, %v2026
            %v2035 = vadd.f32 %v1996, %v2026
            %v2036 = vadd.f32 %v1997, %v2026
            %v2037 = vadd.f32 %v1998, %v2026
            %v2038 = vadd.f32 %v1999, %v2026
            %v2039 = vadd.f32 %v2000, %v2026
            %v2040 = vadd.f32 %v2001, %v2026
            %v2041 = vadd.f32 %v2002, %v2026
            %v2042 = vadd.f32 %v2003, %v2026
            %v2043 = vadd.f32 %v2004, %v2026
            %v2044 = vadd.f32 %v2005, %v2026
            %v2045 = vadd.f32 %v2006, %v2026
            %v2046 = vadd.f32 %v2007, %v2026
            %v2047 = vadd.f32 %v2008, %v2026
            %v2048 = vadd.f32 %v2009, %v2026
            %v2049 = vadd.f32 %v2010, %v2026
            %v2050 = vadd.f32 %v2011, %v2026
            %v2051 = vadd.f32 %v2012, %v2026
            %v2052 = vadd.f32 %v2013, %v2026
            %v2053 = vadd.f32 %v2014, %v2026
            %v2054 = vadd.f32 %v2015, %v2026
            %v2055 = vadd.f32 %v2016, %v2026
            %v2056 = vadd.f32 %v2017, %v2026
            %v2057 = vadd.f32 %v2018, %v2026
            %v2058 = vadd.f32 %v2019, %v2026
            %v2059 = vadd.f32 %v2020, %v2026
            %v2060 = vmax.f32 %v2028, 0.0
            %v2061 = vmax.f32 %v2029, 0.0
            %v2062 = vmax.f32 %v2030, 0.0
            %v2063 = vmax.f32 %v2031, 0.0
            %v2064 = vmax.f32 %v2032, 0.0
            %v2065 = vmax.f32 %v2033, 0.0
            %v2066 = vmax.f32 %v2034, 0.0
            %v2067 = vmax.f32 %v2035, 0.0
            %v2068 = vmax.f32 %v2036, 0.0
            %v2069 = vmax.f32 %v2037, 0.0
            %v2070 = vmax.f32 %v2038, 0.0
            %v2071 = vmax.f32 %v2039, 0.0
            %v2072 = vmax.f32 %v2040, 0.0
            %v2073 = vmax.f32 %v2041, 0.0
            %v2074 = vmax.f32 %v2042, 0.0
            %v2075 = vmax.f32 %v2043, 0.0
            %v2076 = vmax.f32 %v2044, 0.0
            %v2077 = vmax.f32 %v2045, 0.0
            %v2078 = vmax.f32 %v2046, 0.0
            %v2079 = vmax.f32 %v2047, 0.0
            %v2080 = vmax.f32 %v2048, 0.0
            %v2081 = vmax.f32 %v2049, 0.0
            %v2082 = vmax.f32 %v2050, 0.0
            %v2083 = vmax.f32 %v2051, 0.0
            %v2084 = vmax.f32 %v2052, 0.0
            %v2085 = vmax.f32 %v2053, 0.0
            %v2086 = vmax.f32 %v2054, 0.0
            %v2087 = vmax.f32 %v2055, 0.0
            %v2088 = vmax.f32 %v2056, 0.0
            %v2089 = vmax.f32 %v2057, 0.0
            %v2090 = vmax.f32 %v2058, 0.0
            %v2091 = vmax.f32 %v2059, 0.0
            %2092 = vst [vmem:[%s568] sm:$0xff] %v2060
            %2093 = vst [vmem:[%s568 + $0x8] sm:$0xff] %v2061
            %2094 = vst [vmem:[%s568 + $0x10] sm:$0xff] %v2062
            %2095 = vst [vmem:[%s568 + $0x18] sm:$0xff] %v2063
            %2096 = vst [vmem:[%s568 + $0x20] sm:$0xff] %v2064
            %2097 = vst [vmem:[%s568 + $0x28] sm:$0xff] %v2065
            %2098 = vst [vmem:[%s568 + $0x30] sm:$0xff] %v2066
            %2099 = vst [vmem:[%s568 + $0x38] sm:$0xff] %v2067
            %2100 = vst [vmem:[%s568 + $0x40] sm:$0xff] %v2068
            %2101 = vst [vmem:[%s568 + $0x48] sm:$0xff] %v2069
            %2102 = vst [vmem:[%s568 + $0x50] sm:$0xff] %v2070
            %2103 = vst [vmem:[%s568 + $0x58] sm:$0xff] %v2071
            %2104 = vst [vmem:[%s568 + $0x60] sm:$0xff] %v2072
            %2105 = vst [vmem:[%s568 + $0x68] sm:$0xff] %v2073
            %2106 = vst [vmem:[%s568 + $0x70] sm:$0xff] %v2074
            %2107 = vst [vmem:[%s568 + $0x78] sm:$0xff] %v2075
            %2108 = vst [vmem:[%s568 + $0x80] sm:$0xff] %v2076
            %2109 = vst [vmem:[%s568 + $0x88] sm:$0xff] %v2077
            %2110 = vst [vmem:[%s568 + $0x90] sm:$0xff] %v2078
            %2111 = vst [vmem:[%s568 + $0x98] sm:$0xff] %v2079
            %2112 = vst [vmem:[%s568 + $0xa0] sm:$0xff] %v2080
            %2113 = vst [vmem:[%s568 + $0xa8] sm:$0xff] %v2081
            %2114 = vst [vmem:[%s568 + $0xb0] sm:$0xff] %v2082
            %2115 = vst [vmem:[%s568 + $0xb8] sm:$0xff] %v2083
            %2116 = vst [vmem:[%s568 + $0xc0] sm:$0xff] %v2084
            %2117 = vst [vmem:[%s568 + $0xc8] sm:$0xff] %v2085
            %2118 = vst [vmem:[%s568 + $0xd0] sm:$0xff] %v2086
            %2119 = vst [vmem:[%s568 + $0xd8] sm:$0xff] %v2087
            %2120 = vst [vmem:[%s568 + $0xe0] sm:$0xff] %v2088
            %2121 = vst [vmem:[%s568 + $0xe8] sm:$0xff] %v2089
            %2122 = vst [vmem:[%s568 + $0xf0] sm:$0xff] %v2090
            %2123 = vst [vmem:[%s568 + $0xf8] sm:$0xff] %v2091
          $region106: #{tpu_custom_call.1} parent=101 // pred_fallthru
            _
        $region102: #{tpu_custom_call.1} parent=77 // pred_fallthru
          _
        %s2124 = sand.u32 %s212, 1
        %s2125 = scalar_lea.sflag [#allocation6], %s2124
        %s2126 = sand.u32 %s212, 1
        %s2127 = smul.addr %s2126, 256
        %s2128 = scalar_lea.vmem [#allocation9], %s2127
        // Predicated region
        $region107: #{tpu_custom_call.1} parent=77 // pred_check
          %p2129 = pneg %p222
        $region108: #{tpu_custom_call.1} parent=77 // pred_check_branch
          %2131 = sbr.rel (%p2129) target = $region110
        $region109: #{tpu_custom_call.1} parent=77 // pred_region
          %s2132 = smul.u32 32, %s31
          %s2134 = ssub.s32 4096, 4096
          %2135 = vsyncadd %s2125, %s2134
          %s2136 = smul.addr %s2132, 128
          %s2137 = scalar_lea.hbm %s6, %s2136
          %s2138 = sshll.u32 %s2128, 4
          %s2139 = int_to_ptr.vmem [resolvable:$true] %s2138
          %2144 = dma.vmem_to_hbm [thread:$0]  %s2139, 4096, %s2137, %s2125, 128, 128, 8
        $region110: #{tpu_custom_call.1} parent=77 // pred_fallthru
          _
      $region78: #{tpu_custom_call.1} parent=5 // pred_fallthru
        _
      %p2145 = scmp.le.s32.totalorder 2, %s21
      // Predicated region
      $region111: #{tpu_custom_call.1} parent=5 // pred_check
        %p2146 = pneg %p2145
      $region112: #{tpu_custom_call.1} parent=5 // pred_check_branch
        %2148 = sbr.rel (%p2146) target = $region114
      $region113: #{tpu_custom_call.1} parent=5 // pred_region
        %s2149 = ssub.s32 %s21, 2
        // Predicated region
        $region115: #{tpu_custom_call.1} parent=113 // pred_check
          %p2150 = pneg %p228
        $region116: #{tpu_custom_call.1} parent=113 // pred_check_branch
          %2152 = sbr.rel (%p2150) target = $region118
        $region117: #{tpu_custom_call.1} parent=113 // pred_region
          %s2153 = sand.u32 %s213, 1
          %s2154 = scalar_lea.sflag [#allocation6], %s2153
          %s2155 = sand.u32 %s213, 1
          %s2156 = smul.addr %s2155, 256
          %s2157 = scalar_lea.vmem [#allocation9], %s2156
          %2158 = dma.done %s2154, 4096
        $region118: #{tpu_custom_call.1} parent=113 // pred_fallthru
          _
      $region114: #{tpu_custom_call.1} parent=5 // pred_fallthru
        _
    $region6: #{tpu_custom_call.1} parent=1 // loop_footer
      %s25 = sadd.s32 1, %s21
    $region7: #{tpu_custom_call.1} parent=1 // loop_footer_branch
      %20 = sbr.rel target = $region3
    $region8: #{tpu_custom_call.1} parent=1 // loop_exit
      _
    %2159 = vsyncpa [#allocation5], 1
    %s2160 = scalar_lea.sflag [#allocation5], 1
    %2161 = vsyncpa %s2160, 1
    %2162 = vsyncpa [#allocation8], 1
    %s2163 = scalar_lea.sflag [#allocation8], 1
    %2164 = vsyncpa %s2163, 1
    %2165 = vsyncpa [#allocation6], 1
    %s2166 = scalar_lea.sflag [#allocation6], 1
    %2167 = vsyncpa %s2166, 1

</llo_original>
